<compile_context>
chip_gen: v7x
topology: tpu7x:2x2x1
jax: 0.10.0
libtpu: 0.0.40
codegen_flags: <defaults>
</compile_context>

<pallas_src>
import jax
import jax.numpy as jnp
from jax.experimental import pallas as pl
from jax.experimental.pallas import tpu as pltpu


def _dwt_kernel(x_ref, o_ref, t_ref):
    # x_ref: (Cb, 2*TH, W)   raw NCHW rows for Cb channels
    # o_ref: (4, Cb, TH, W2) sub-band major output block (LL, HL, LH, HH)
    # t_ref: (W, TH) f32 scratch -- one transposed row-parity tile
    cb, two_th, w = x_ref.shape
    th = two_th // 2
    w2 = w // 2
    out_dtype = o_ref.dtype

    # --- row parity: sublane-strided loads; slice-only indexers (no ints) ------
    rows_even = x_ref[:, pl.ds(0, th, stride=2), :].astype(jnp.float32)  # x[2i  , :]
    rows_odd = x_ref[:, pl.ds(1, th, stride=2), :].astype(jnp.float32)   # x[2i+1, :]

    for ci in range(cb):  # static unroll, Cb is capped small
        # --- column parity: transpose so columns become sublanes, then read
        #     even/odd columns with a (slice-only) strided indexer on the scratch.
        t_ref[...] = rows_even[ci].T                           # (W, TH)
        x1 = t_ref[pl.ds(0, w2, stride=2), :] * 0.5            # x[2i  , 2j  ] / 2  (transposed)
        x3 = t_ref[pl.ds(1, w2, stride=2), :] * 0.5            # x[2i  , 2j+1] / 2

        t_ref[...] = rows_odd[ci].T
        x2 = t_ref[pl.ds(0, w2, stride=2), :] * 0.5            # x[2i+1, 2j  ] / 2
        x4 = t_ref[pl.ds(1, w2, stride=2), :] * 0.5            # x[2i+1, 2j+1] / 2

        # --- sub-bands, same operand order as the reference (bit-exact in f32) --
        o_ref[0, ci] = (x1 + x2 + x3 + x4).T.astype(out_dtype)    # LL
        o_ref[1, ci] = (-x1 - x2 + x3 + x4).T.astype(out_dtype)   # HL
        o_ref[2, ci] = (-x1 + x2 - x3 + x4).T.astype(out_dtype)   # LH
        o_ref[3, ci] = (x1 - x2 - x3 + x4).T.astype(out_dtype)    # HH


_BLOCK_BUDGET = 2 * 1024 * 1024   # target (in + out) bytes per grid step, single buffer
_MAX_CHANNEL_FOLD = 8             # cap on channels folded into one block (unroll bound)


def _pick_row_tile(h2, bytes_per_row_pair):
    """Largest TH with TH | H2 and (TH % 8 == 0 or TH == H2) fitting the budget."""
    cands = {h2}
    for d in range(8, h2 + 1, 8):
        if h2 % d == 0:
            cands.add(d)
    fitting = [d for d in cands if d * bytes_per_row_pair <= _BLOCK_BUDGET]
    return max(fitting) if fitting else min(cands)


def _pick_channel_fold(c, bytes_per_channel):
    best = 1
    for d in range(1, min(c, _MAX_CHANNEL_FOLD) + 1):
        if c % d == 0 and d * bytes_per_channel <= _BLOCK_BUDGET:
            best = d
    return best


def dwt(x):
    """Discrete (Haar) wavelet transform: [B, C, H, W] -> [B, 4C, H/2, W/2]."""
    B, C, H, W = x.shape
    assert H % 2 == 0 and W % 2 == 0, "H and W must be even"
    H2, W2 = H // 2, W // 2

    isz = x.dtype.itemsize
    # one input row-pair (2*W) plus its 4 output rows (4*W2 = 2*W), per channel
    bytes_per_row_pair = 2 * W * 2 * isz
    TH = _pick_row_tile(H2, bytes_per_row_pair)
    Cb = _pick_channel_fold(C, TH * bytes_per_row_pair)

    grid = (B, C // Cb, H2 // TH)

    out = pl.pallas_call(
        _dwt_kernel,
        out_shape=jax.ShapeDtypeStruct((B, 4, C, H2, W2), x.dtype),
        grid_spec=pltpu.PrefetchScalarGridSpec(
            num_scalar_prefetch=0,
            grid=grid,
            in_specs=[
                pl.BlockSpec((None, Cb, 2 * TH, W), lambda b, c, h: (b, c, h, 0)),
            ],
            out_specs=pl.BlockSpec(
                (None, 4, Cb, TH, W2), lambda b, c, h: (b, 0, c, h, 0)),
            scratch_shapes=[pltpu.VMEM((W, TH), jnp.float32)],
        ),
        compiler_params=pltpu.CompilerParams(
            dimension_semantics=("parallel", "parallel", "parallel")),
    )(x)

    # Sub-band major (B, 4, C, H2, W2) -> torch.cat((LL, HL, LH, HH), 1) layout.
    return out.reshape(B, 4 * C, H2, W2)


def dwt_ref(x):
    """Pure-JAX reference, mirrors the PyTorch dwt_init exactly."""
    x01 = x[:, :, 0::2, :] / 2
    x02 = x[:, :, 1::2, :] / 2
    x1 = x01[:, :, :, 0::2]
    x2 = x02[:, :, :, 0::2]
    x3 = x01[:, :, :, 1::2]
    x4 = x02[:, :, :, 1::2]
    x_LL = x1 + x2 + x3 + x4
    x_HL = -x1 - x2 + x3 + x4
    x_LH = -x1 + x2 - x3 + x4
    x_HH = x1 - x2 - x3 + x4
    return jnp.concatenate((x_LL, x_HL, x_LH, x_HH), axis=1)


if __name__ == "__main__":
    # Canonical small shape from the module spec.
    x = jax.random.normal(jax.random.PRNGKey(0), (2, 4, 16, 16), dtype=jnp.float32)
    y = dwt(x)
    jax.block_until_ready(y)
    assert y.shape == (2, 16, 8, 8), y.shape
    assert jnp.allclose(y, dwt_ref(x), atol=1e-6, rtol=1e-6), "mismatch (16x16)"

    # Larger, TPU-friendly shape exercising the tiled / lane-dense (W2=128) path.
    x_large = jax.random.normal(jax.random.PRNGKey(1), (2, 3, 64, 256), dtype=jnp.float32)
    y_large = dwt(x_large)
    jax.block_until_ready(y_large)
    assert y_large.shape == (2, 12, 32, 128), y_large.shape
    assert jnp.allclose(y_large, dwt_ref(x_large), atol=1e-6, rtol=1e-6), "mismatch (64x256)"

    print("KERNEL_OK")
</pallas_src>

<mosaic_0001>
module attributes {stable_mosaic.version = 11 : i64} {
  func.func @_dwt_kernel(%arg0: i32, %arg1: i32, %arg2: i32, %arg3: memref<1x4x16x16xf32, #tpu.memory_space<vmem>>, %arg4: memref<1x4x4x8x8xf32, #tpu.memory_space<vmem>>, %arg5: memref<16x8xf32, #tpu.memory_space<vmem>>) attributes {dimension_semantics = [#tpu.dimension_semantics<parallel>, #tpu.dimension_semantics<parallel>, #tpu.dimension_semantics<parallel>], iteration_bounds = array<i64: 2, 1, 1>, scalar_prefetch = 0 : i64, scratch_operands = 1 : i64, tpu.core_type = #tpu.core_type<tc>, window_params = [{transform_indices = @transform_0, window_bounds = array<i64: 1, 4, 16, 16>}, {transform_indices = @transform_1, window_bounds = array<i64: 1, 4, 4, 8, 8>}]} {
    %c0 = arith.constant 0 : index
    %c0_0 = arith.constant 0 : index
    %c0_1 = arith.constant 0 : index
    %c0_2 = arith.constant 0 : index
    %0 = tpu.strided_load %arg3[%c0, %c0_0, %c0_1, %c0_2] {strides = array<i32: 1, 1, 2, 1>} : memref<1x4x16x16xf32, #tpu.memory_space<vmem>>, vector<1x4x8x16xf32>
    %1 = vector.shape_cast %0 : vector<1x4x8x16xf32> to vector<4x8x16xf32>
    %c0_3 = arith.constant 0 : index
    %c0_4 = arith.constant 0 : index
    %c1 = arith.constant 1 : index
    %c0_5 = arith.constant 0 : index
    %2 = tpu.strided_load %arg3[%c0_3, %c0_4, %c1, %c0_5] {strides = array<i32: 1, 1, 2, 1>} : memref<1x4x16x16xf32, #tpu.memory_space<vmem>>, vector<1x4x8x16xf32>
    %3 = vector.shape_cast %2 : vector<1x4x8x16xf32> to vector<4x8x16xf32>
    %4 = vector.extract_strided_slice %1 {offsets = [0, 0, 0], sizes = [1, 8, 16], strides = [1, 1, 1]} : vector<4x8x16xf32> to vector<1x8x16xf32>
    %5 = vector.shape_cast %4 : vector<1x8x16xf32> to vector<8x16xf32>
    %6 = tpu.transpose %5, [1, 0] : vector<8x16xf32> -> vector<16x8xf32>
    %c0_6 = arith.constant 0 : index
    %c0_7 = arith.constant 0 : index
    %7 = vector.load %arg5[%c0_6, %c0_7] : memref<16x8xf32, #tpu.memory_space<vmem>>, vector<16x8xf32>
    tpu.vector_store %arg5[%c0_6, %c0_7], %6 {strides = array<i32>} : memref<16x8xf32, #tpu.memory_space<vmem>>, vector<16x8xf32>,
    %c0_8 = arith.constant 0 : index
    %c0_9 = arith.constant 0 : index
    %8 = tpu.strided_load %arg5[%c0_8, %c0_9] {strides = array<i32: 2, 1>} : memref<16x8xf32, #tpu.memory_space<vmem>>, vector<8x8xf32>
    %cst = arith.constant 5.000000e-01 : f32
    %9 = vector.broadcast %cst : f32 to vector<8x8xf32>
    %10 = arith.mulf %8, %9 : vector<8x8xf32>
    %c1_10 = arith.constant 1 : index
    %c0_11 = arith.constant 0 : index
    %11 = tpu.strided_load %arg5[%c1_10, %c0_11] {strides = array<i32: 2, 1>} : memref<16x8xf32, #tpu.memory_space<vmem>>, vector<8x8xf32>
    %cst_12 = arith.constant 5.000000e-01 : f32
    %12 = vector.broadcast %cst_12 : f32 to vector<8x8xf32>
    %13 = arith.mulf %11, %12 : vector<8x8xf32>
    %14 = vector.extract_strided_slice %3 {offsets = [0, 0, 0], sizes = [1, 8, 16], strides = [1, 1, 1]} : vector<4x8x16xf32> to vector<1x8x16xf32>
    %15 = vector.shape_cast %14 : vector<1x8x16xf32> to vector<8x16xf32>
    %16 = tpu.transpose %15, [1, 0] : vector<8x16xf32> -> vector<16x8xf32>
    %c0_13 = arith.constant 0 : index
    %c0_14 = arith.constant 0 : index
    %17 = vector.load %arg5[%c0_13, %c0_14] : memref<16x8xf32, #tpu.memory_space<vmem>>, vector<16x8xf32>
    tpu.vector_store %arg5[%c0_13, %c0_14], %16 {strides = array<i32>} : memref<16x8xf32, #tpu.memory_space<vmem>>, vector<16x8xf32>,
    %c0_15 = arith.constant 0 : index
    %c0_16 = arith.constant 0 : index
    %18 = tpu.strided_load %arg5[%c0_15, %c0_16] {strides = array<i32: 2, 1>} : memref<16x8xf32, #tpu.memory_space<vmem>>, vector<8x8xf32>
    %cst_17 = arith.constant 5.000000e-01 : f32
    %19 = vector.broadcast %cst_17 : f32 to vector<8x8xf32>
    %20 = arith.mulf %18, %19 : vector<8x8xf32>
    %c1_18 = arith.constant 1 : index
    %c0_19 = arith.constant 0 : index
    %21 = tpu.strided_load %arg5[%c1_18, %c0_19] {strides = array<i32: 2, 1>} : memref<16x8xf32, #tpu.memory_space<vmem>>, vector<8x8xf32>
    %cst_20 = arith.constant 5.000000e-01 : f32
    %22 = vector.broadcast %cst_20 : f32 to vector<8x8xf32>
    %23 = arith.mulf %21, %22 : vector<8x8xf32>
    %24 = arith.addf %10, %20 : vector<8x8xf32>
    %25 = arith.addf %24, %13 : vector<8x8xf32>
    %26 = arith.addf %25, %23 : vector<8x8xf32>
    %27 = tpu.transpose %26, [1, 0] : vector<8x8xf32> -> vector<8x8xf32>
    %c0_21 = arith.constant 0 : index
    %c0_22 = arith.constant 0 : index
    %c0_23 = arith.constant 0 : index
    %c0_24 = arith.constant 0 : index
    %c0_25 = arith.constant 0 : index
    %28 = vector.load %arg4[%c0_21, %c0_22, %c0_23, %c0_24, %c0_25] : memref<1x4x4x8x8xf32, #tpu.memory_space<vmem>>, vector<1x1x1x8x8xf32>
    %29 = vector.shape_cast %28 : vector<1x1x1x8x8xf32> to vector<8x8xf32>
    %30 = vector.shape_cast %27 : vector<8x8xf32> to vector<1x1x1x8x8xf32>
    tpu.vector_store %arg4[%c0_21, %c0_22, %c0_23, %c0_24, %c0_25], %30 {strides = array<i32>} : memref<1x4x4x8x8xf32, #tpu.memory_space<vmem>>, vector<1x1x1x8x8xf32>,
    %cst_26 = arith.constant 0.000000e+00 : f32
    %31 = vector.broadcast %cst_26 : f32 to vector<8x8xf32>
    %32 = arith.subf %31, %10 : vector<8x8xf32>
    %33 = arith.subf %32, %20 : vector<8x8xf32>
    %34 = arith.addf %33, %13 : vector<8x8xf32>
    %35 = arith.addf %34, %23 : vector<8x8xf32>
    %36 = tpu.transpose %35, [1, 0] : vector<8x8xf32> -> vector<8x8xf32>
    %c0_27 = arith.constant 0 : index
    %c1_28 = arith.constant 1 : index
    %c0_29 = arith.constant 0 : index
    %c0_30 = arith.constant 0 : index
    %c0_31 = arith.constant 0 : index
    %37 = vector.load %arg4[%c0_27, %c1_28, %c0_29, %c0_30, %c0_31] : memref<1x4x4x8x8xf32, #tpu.memory_space<vmem>>, vector<1x1x1x8x8xf32>
    %38 = vector.shape_cast %37 : vector<1x1x1x8x8xf32> to vector<8x8xf32>
    %39 = vector.shape_cast %36 : vector<8x8xf32> to vector<1x1x1x8x8xf32>
    tpu.vector_store %arg4[%c0_27, %c1_28, %c0_29, %c0_30, %c0_31], %39 {strides = array<i32>} : memref<1x4x4x8x8xf32, #tpu.memory_space<vmem>>, vector<1x1x1x8x8xf32>,
    %cst_32 = arith.constant 0.000000e+00 : f32
    %40 = vector.broadcast %cst_32 : f32 to vector<8x8xf32>
    %41 = arith.subf %40, %10 : vector<8x8xf32>
    %42 = arith.addf %41, %20 : vector<8x8xf32>
    %43 = arith.subf %42, %13 : vector<8x8xf32>
    %44 = arith.addf %43, %23 : vector<8x8xf32>
    %45 = tpu.transpose %44, [1, 0] : vector<8x8xf32> -> vector<8x8xf32>
    %c0_33 = arith.constant 0 : index
    %c2 = arith.constant 2 : index
    %c0_34 = arith.constant 0 : index
    %c0_35 = arith.constant 0 : index
    %c0_36 = arith.constant 0 : index
    %46 = vector.load %arg4[%c0_33, %c2, %c0_34, %c0_35, %c0_36] : memref<1x4x4x8x8xf32, #tpu.memory_space<vmem>>, vector<1x1x1x8x8xf32>
    %47 = vector.shape_cast %46 : vector<1x1x1x8x8xf32> to vector<8x8xf32>
    %48 = vector.shape_cast %45 : vector<8x8xf32> to vector<1x1x1x8x8xf32>
    tpu.vector_store %arg4[%c0_33, %c2, %c0_34, %c0_35, %c0_36], %48 {strides = array<i32>} : memref<1x4x4x8x8xf32, #tpu.memory_space<vmem>>, vector<1x1x1x8x8xf32>,
    %49 = arith.subf %10, %20 : vector<8x8xf32>
    %50 = arith.subf %49, %13 : vector<8x8xf32>
    %51 = arith.addf %50, %23 : vector<8x8xf32>
    %52 = tpu.transpose %51, [1, 0] : vector<8x8xf32> -> vector<8x8xf32>
    %c0_37 = arith.constant 0 : index
    %c3 = arith.constant 3 : index
    %c0_38 = arith.constant 0 : index
    %c0_39 = arith.constant 0 : index
    %c0_40 = arith.constant 0 : index
    %53 = vector.load %arg4[%c0_37, %c3, %c0_38, %c0_39, %c0_40] : memref<1x4x4x8x8xf32, #tpu.memory_space<vmem>>, vector<1x1x1x8x8xf32>
    %54 = vector.shape_cast %53 : vector<1x1x1x8x8xf32> to vector<8x8xf32>
    %55 = vector.shape_cast %52 : vector<8x8xf32> to vector<1x1x1x8x8xf32>
    tpu.vector_store %arg4[%c0_37, %c3, %c0_38, %c0_39, %c0_40], %55 {strides = array<i32>} : memref<1x4x4x8x8xf32, #tpu.memory_space<vmem>>, vector<1x1x1x8x8xf32>,
    %56 = vector.extract_strided_slice %1 {offsets = [1, 0, 0], sizes = [1, 8, 16], strides = [1, 1, 1]} : vector<4x8x16xf32> to vector<1x8x16xf32>
    %57 = vector.shape_cast %56 : vector<1x8x16xf32> to vector<8x16xf32>
    %58 = tpu.transpose %57, [1, 0] : vector<8x16xf32> -> vector<16x8xf32>
    %c0_41 = arith.constant 0 : index
    %c0_42 = arith.constant 0 : index
    %59 = vector.load %arg5[%c0_41, %c0_42] : memref<16x8xf32, #tpu.memory_space<vmem>>, vector<16x8xf32>
    tpu.vector_store %arg5[%c0_41, %c0_42], %58 {strides = array<i32>} : memref<16x8xf32, #tpu.memory_space<vmem>>, vector<16x8xf32>,
    %c0_43 = arith.constant 0 : index
    %c0_44 = arith.constant 0 : index
    %60 = tpu.strided_load %arg5[%c0_43, %c0_44] {strides = array<i32: 2, 1>} : memref<16x8xf32, #tpu.memory_space<vmem>>, vector<8x8xf32>
    %cst_45 = arith.constant 5.000000e-01 : f32
    %61 = vector.broadcast %cst_45 : f32 to vector<8x8xf32>
    %62 = arith.mulf %60, %61 : vector<8x8xf32>
    %c1_46 = arith.constant 1 : index
    %c0_47 = arith.constant 0 : index
    %63 = tpu.strided_load %arg5[%c1_46, %c0_47] {strides = array<i32: 2, 1>} : memref<16x8xf32, #tpu.memory_space<vmem>>, vector<8x8xf32>
    %cst_48 = arith.constant 5.000000e-01 : f32
    %64 = vector.broadcast %cst_48 : f32 to vector<8x8xf32>
    %65 = arith.mulf %63, %64 : vector<8x8xf32>
    %66 = vector.extract_strided_slice %3 {offsets = [1, 0, 0], sizes = [1, 8, 16], strides = [1, 1, 1]} : vector<4x8x16xf32> to vector<1x8x16xf32>
    %67 = vector.shape_cast %66 : vector<1x8x16xf32> to vector<8x16xf32>
    %68 = tpu.transpose %67, [1, 0] : vector<8x16xf32> -> vector<16x8xf32>
    %c0_49 = arith.constant 0 : index
    %c0_50 = arith.constant 0 : index
    %69 = vector.load %arg5[%c0_49, %c0_50] : memref<16x8xf32, #tpu.memory_space<vmem>>, vector<16x8xf32>
    tpu.vector_store %arg5[%c0_49, %c0_50], %68 {strides = array<i32>} : memref<16x8xf32, #tpu.memory_space<vmem>>, vector<16x8xf32>,
    %c0_51 = arith.constant 0 : index
    %c0_52 = arith.constant 0 : index
    %70 = tpu.strided_load %arg5[%c0_51, %c0_52] {strides = array<i32: 2, 1>} : memref<16x8xf32, #tpu.memory_space<vmem>>, vector<8x8xf32>
    %cst_53 = arith.constant 5.000000e-01 : f32
    %71 = vector.broadcast %cst_53 : f32 to vector<8x8xf32>
    %72 = arith.mulf %70, %71 : vector<8x8xf32>
    %c1_54 = arith.constant 1 : index
    %c0_55 = arith.constant 0 : index
    %73 = tpu.strided_load %arg5[%c1_54, %c0_55] {strides = array<i32: 2, 1>} : memref<16x8xf32, #tpu.memory_space<vmem>>, vector<8x8xf32>
    %cst_56 = arith.constant 5.000000e-01 : f32
    %74 = vector.broadcast %cst_56 : f32 to vector<8x8xf32>
    %75 = arith.mulf %73, %74 : vector<8x8xf32>
    %76 = arith.addf %62, %72 : vector<8x8xf32>
    %77 = arith.addf %76, %65 : vector<8x8xf32>
    %78 = arith.addf %77, %75 : vector<8x8xf32>
    %79 = tpu.transpose %78, [1, 0] : vector<8x8xf32> -> vector<8x8xf32>
    %c0_57 = arith.constant 0 : index
    %c0_58 = arith.constant 0 : index
    %c1_59 = arith.constant 1 : index
    %c0_60 = arith.constant 0 : index
    %c0_61 = arith.constant 0 : index
    %80 = vector.load %arg4[%c0_57, %c0_58, %c1_59, %c0_60, %c0_61] : memref<1x4x4x8x8xf32, #tpu.memory_space<vmem>>, vector<1x1x1x8x8xf32>
    %81 = vector.shape_cast %80 : vector<1x1x1x8x8xf32> to vector<8x8xf32>
    %82 = vector.shape_cast %79 : vector<8x8xf32> to vector<1x1x1x8x8xf32>
    tpu.vector_store %arg4[%c0_57, %c0_58, %c1_59, %c0_60, %c0_61], %82 {strides = array<i32>} : memref<1x4x4x8x8xf32, #tpu.memory_space<vmem>>, vector<1x1x1x8x8xf32>,
    %cst_62 = arith.constant 0.000000e+00 : f32
    %83 = vector.broadcast %cst_62 : f32 to vector<8x8xf32>
    %84 = arith.subf %83, %62 : vector<8x8xf32>
    %85 = arith.subf %84, %72 : vector<8x8xf32>
    %86 = arith.addf %85, %65 : vector<8x8xf32>
    %87 = arith.addf %86, %75 : vector<8x8xf32>
    %88 = tpu.transpose %87, [1, 0] : vector<8x8xf32> -> vector<8x8xf32>
    %c0_63 = arith.constant 0 : index
    %c1_64 = arith.constant 1 : index
    %c1_65 = arith.constant 1 : index
    %c0_66 = arith.constant 0 : index
    %c0_67 = arith.constant 0 : index
    %89 = vector.load %arg4[%c0_63, %c1_64, %c1_65, %c0_66, %c0_67] : memref<1x4x4x8x8xf32, #tpu.memory_space<vmem>>, vector<1x1x1x8x8xf32>
    %90 = vector.shape_cast %89 : vector<1x1x1x8x8xf32> to vector<8x8xf32>
    %91 = vector.shape_cast %88 : vector<8x8xf32> to vector<1x1x1x8x8xf32>
    tpu.vector_store %arg4[%c0_63, %c1_64, %c1_65, %c0_66, %c0_67], %91 {strides = array<i32>} : memref<1x4x4x8x8xf32, #tpu.memory_space<vmem>>, vector<1x1x1x8x8xf32>,
    %cst_68 = arith.constant 0.000000e+00 : f32
    %92 = vector.broadcast %cst_68 : f32 to vector<8x8xf32>
    %93 = arith.subf %92, %62 : vector<8x8xf32>
    %94 = arith.addf %93, %72 : vector<8x8xf32>
    %95 = arith.subf %94, %65 : vector<8x8xf32>
    %96 = arith.addf %95, %75 : vector<8x8xf32>
    %97 = tpu.transpose %96, [1, 0] : vector<8x8xf32> -> vector<8x8xf32>
    %c0_69 = arith.constant 0 : index
    %c2_70 = arith.constant 2 : index
    %c1_71 = arith.constant 1 : index
    %c0_72 = arith.constant 0 : index
    %c0_73 = arith.constant 0 : index
    %98 = vector.load %arg4[%c0_69, %c2_70, %c1_71, %c0_72, %c0_73] : memref<1x4x4x8x8xf32, #tpu.memory_space<vmem>>, vector<1x1x1x8x8xf32>
    %99 = vector.shape_cast %98 : vector<1x1x1x8x8xf32> to vector<8x8xf32>
    %100 = vector.shape_cast %97 : vector<8x8xf32> to vector<1x1x1x8x8xf32>
    tpu.vector_store %arg4[%c0_69, %c2_70, %c1_71, %c0_72, %c0_73], %100 {strides = array<i32>} : memref<1x4x4x8x8xf32, #tpu.memory_space<vmem>>, vector<1x1x1x8x8xf32>,
    %101 = arith.subf %62, %72 : vector<8x8xf32>
    %102 = arith.subf %101, %65 : vector<8x8xf32>
    %103 = arith.addf %102, %75 : vector<8x8xf32>
    %104 = tpu.transpose %103, [1, 0] : vector<8x8xf32> -> vector<8x8xf32>
    %c0_74 = arith.constant 0 : index
    %c3_75 = arith.constant 3 : index
    %c1_76 = arith.constant 1 : index
    %c0_77 = arith.constant 0 : index
    %c0_78 = arith.constant 0 : index
    %105 = vector.load %arg4[%c0_74, %c3_75, %c1_76, %c0_77, %c0_78] : memref<1x4x4x8x8xf32, #tpu.memory_space<vmem>>, vector<1x1x1x8x8xf32>
    %106 = vector.shape_cast %105 : vector<1x1x1x8x8xf32> to vector<8x8xf32>
    %107 = vector.shape_cast %104 : vector<8x8xf32> to vector<1x1x1x8x8xf32>
    tpu.vector_store %arg4[%c0_74, %c3_75, %c1_76, %c0_77, %c0_78], %107 {strides = array<i32>} : memref<1x4x4x8x8xf32, #tpu.memory_space<vmem>>, vector<1x1x1x8x8xf32>,
    %108 = vector.extract_strided_slice %1 {offsets = [2, 0, 0], sizes = [1, 8, 16], strides = [1, 1, 1]} : vector<4x8x16xf32> to vector<1x8x16xf32>
    %109 = vector.shape_cast %108 : vector<1x8x16xf32> to vector<8x16xf32>
    %110 = tpu.transpose %109, [1, 0] : vector<8x16xf32> -> vector<16x8xf32>
    %c0_79 = arith.constant 0 : index
    %c0_80 = arith.constant 0 : index
    %111 = vector.load %arg5[%c0_79, %c0_80] : memref<16x8xf32, #tpu.memory_space<vmem>>, vector<16x8xf32>
    tpu.vector_store %arg5[%c0_79, %c0_80], %110 {strides = array<i32>} : memref<16x8xf32, #tpu.memory_space<vmem>>, vector<16x8xf32>,
    %c0_81 = arith.constant 0 : index
    %c0_82 = arith.constant 0 : index
    %112 = tpu.strided_load %arg5[%c0_81, %c0_82] {strides = array<i32: 2, 1>} : memref<16x8xf32, #tpu.memory_space<vmem>>, vector<8x8xf32>
    %cst_83 = arith.constant 5.000000e-01 : f32
    %113 = vector.broadcast %cst_83 : f32 to vector<8x8xf32>
    %114 = arith.mulf %112, %113 : vector<8x8xf32>
    %c1_84 = arith.constant 1 : index
    %c0_85 = arith.constant 0 : index
    %115 = tpu.strided_load %arg5[%c1_84, %c0_85] {strides = array<i32: 2, 1>} : memref<16x8xf32, #tpu.memory_space<vmem>>, vector<8x8xf32>
    %cst_86 = arith.constant 5.000000e-01 : f32
    %116 = vector.broadcast %cst_86 : f32 to vector<8x8xf32>
    %117 = arith.mulf %115, %116 : vector<8x8xf32>
    %118 = vector.extract_strided_slice %3 {offsets = [2, 0, 0], sizes = [1, 8, 16], strides = [1, 1, 1]} : vector<4x8x16xf32> to vector<1x8x16xf32>
    %119 = vector.shape_cast %118 : vector<1x8x16xf32> to vector<8x16xf32>
    %120 = tpu.transpose %119, [1, 0] : vector<8x16xf32> -> vector<16x8xf32>
    %c0_87 = arith.constant 0 : index
    %c0_88 = arith.constant 0 : index
    %121 = vector.load %arg5[%c0_87, %c0_88] : memref<16x8xf32, #tpu.memory_space<vmem>>, vector<16x8xf32>
    tpu.vector_store %arg5[%c0_87, %c0_88], %120 {strides = array<i32>} : memref<16x8xf32, #tpu.memory_space<vmem>>, vector<16x8xf32>,
    %c0_89 = arith.constant 0 : index
    %c0_90 = arith.constant 0 : index
    %122 = tpu.strided_load %arg5[%c0_89, %c0_90] {strides = array<i32: 2, 1>} : memref<16x8xf32, #tpu.memory_space<vmem>>, vector<8x8xf32>
    %cst_91 = arith.constant 5.000000e-01 : f32
    %123 = vector.broadcast %cst_91 : f32 to vector<8x8xf32>
    %124 = arith.mulf %122, %123 : vector<8x8xf32>
    %c1_92 = arith.constant 1 : index
    %c0_93 = arith.constant 0 : index
    %125 = tpu.strided_load %arg5[%c1_92, %c0_93] {strides = array<i32: 2, 1>} : memref<16x8xf32, #tpu.memory_space<vmem>>, vector<8x8xf32>
    %cst_94 = arith.constant 5.000000e-01 : f32
    %126 = vector.broadcast %cst_94 : f32 to vector<8x8xf32>
    %127 = arith.mulf %125, %126 : vector<8x8xf32>
    %128 = arith.addf %114, %124 : vector<8x8xf32>
    %129 = arith.addf %128, %117 : vector<8x8xf32>
    %130 = arith.addf %129, %127 : vector<8x8xf32>
    %131 = tpu.transpose %130, [1, 0] : vector<8x8xf32> -> vector<8x8xf32>
    %c0_95 = arith.constant 0 : index
    %c0_96 = arith.constant 0 : index
    %c2_97 = arith.constant 2 : index
    %c0_98 = arith.constant 0 : index
    %c0_99 = arith.constant 0 : index
    %132 = vector.load %arg4[%c0_95, %c0_96, %c2_97, %c0_98, %c0_99] : memref<1x4x4x8x8xf32, #tpu.memory_space<vmem>>, vector<1x1x1x8x8xf32>
    %133 = vector.shape_cast %132 : vector<1x1x1x8x8xf32> to vector<8x8xf32>
    %134 = vector.shape_cast %131 : vector<8x8xf32> to vector<1x1x1x8x8xf32>
    tpu.vector_store %arg4[%c0_95, %c0_96, %c2_97, %c0_98, %c0_99], %134 {strides = array<i32>} : memref<1x4x4x8x8xf32, #tpu.memory_space<vmem>>, vector<1x1x1x8x8xf32>,
    %cst_100 = arith.constant 0.000000e+00 : f32
    %135 = vector.broadcast %cst_100 : f32 to vector<8x8xf32>
    %136 = arith.subf %135, %114 : vector<8x8xf32>
    %137 = arith.subf %136, %124 : vector<8x8xf32>
    %138 = arith.addf %137, %117 : vector<8x8xf32>
    %139 = arith.addf %138, %127 : vector<8x8xf32>
    %140 = tpu.transpose %139, [1, 0] : vector<8x8xf32> -> vector<8x8xf32>
    %c0_101 = arith.constant 0 : index
    %c1_102 = arith.constant 1 : index
    %c2_103 = arith.constant 2 : index
    %c0_104 = arith.constant 0 : index
    %c0_105 = arith.constant 0 : index
    %141 = vector.load %arg4[%c0_101, %c1_102, %c2_103, %c0_104, %c0_105] : memref<1x4x4x8x8xf32, #tpu.memory_space<vmem>>, vector<1x1x1x8x8xf32>
    %142 = vector.shape_cast %141 : vector<1x1x1x8x8xf32> to vector<8x8xf32>
    %143 = vector.shape_cast %140 : vector<8x8xf32> to vector<1x1x1x8x8xf32>
    tpu.vector_store %arg4[%c0_101, %c1_102, %c2_103, %c0_104, %c0_105], %143 {strides = array<i32>} : memref<1x4x4x8x8xf32, #tpu.memory_space<vmem>>, vector<1x1x1x8x8xf32>,
    %cst_106 = arith.constant 0.000000e+00 : f32
    %144 = vector.broadcast %cst_106 : f32 to vector<8x8xf32>
    %145 = arith.subf %144, %114 : vector<8x8xf32>
    %146 = arith.addf %145, %124 : vector<8x8xf32>
    %147 = arith.subf %146, %117 : vector<8x8xf32>
    %148 = arith.addf %147, %127 : vector<8x8xf32>
    %149 = tpu.transpose %148, [1, 0] : vector<8x8xf32> -> vector<8x8xf32>
    %c0_107 = arith.constant 0 : index
    %c2_108 = arith.constant 2 : index
    %c2_109 = arith.constant 2 : index
    %c0_110 = arith.constant 0 : index
    %c0_111 = arith.constant 0 : index
    %150 = vector.load %arg4[%c0_107, %c2_108, %c2_109, %c0_110, %c0_111] : memref<1x4x4x8x8xf32, #tpu.memory_space<vmem>>, vector<1x1x1x8x8xf32>
    %151 = vector.shape_cast %150 : vector<1x1x1x8x8xf32> to vector<8x8xf32>
    %152 = vector.shape_cast %149 : vector<8x8xf32> to vector<1x1x1x8x8xf32>
    tpu.vector_store %arg4[%c0_107, %c2_108, %c2_109, %c0_110, %c0_111], %152 {strides = array<i32>} : memref<1x4x4x8x8xf32, #tpu.memory_space<vmem>>, vector<1x1x1x8x8xf32>,
    %153 = arith.subf %114, %124 : vector<8x8xf32>
    %154 = arith.subf %153, %117 : vector<8x8xf32>
    %155 = arith.addf %154, %127 : vector<8x8xf32>
    %156 = tpu.transpose %155, [1, 0] : vector<8x8xf32> -> vector<8x8xf32>
    %c0_112 = arith.constant 0 : index
    %c3_113 = arith.constant 3 : index
    %c2_114 = arith.constant 2 : index
    %c0_115 = arith.constant 0 : index
    %c0_116 = arith.constant 0 : index
    %157 = vector.load %arg4[%c0_112, %c3_113, %c2_114, %c0_115, %c0_116] : memref<1x4x4x8x8xf32, #tpu.memory_space<vmem>>, vector<1x1x1x8x8xf32>
    %158 = vector.shape_cast %157 : vector<1x1x1x8x8xf32> to vector<8x8xf32>
    %159 = vector.shape_cast %156 : vector<8x8xf32> to vector<1x1x1x8x8xf32>
    tpu.vector_store %arg4[%c0_112, %c3_113, %c2_114, %c0_115, %c0_116], %159 {strides = array<i32>} : memref<1x4x4x8x8xf32, #tpu.memory_space<vmem>>, vector<1x1x1x8x8xf32>,
    %160 = vector.extract_strided_slice %1 {offsets = [3, 0, 0], sizes = [1, 8, 16], strides = [1, 1, 1]} : vector<4x8x16xf32> to vector<1x8x16xf32>
    %161 = vector.shape_cast %160 : vector<1x8x16xf32> to vector<8x16xf32>
    %162 = tpu.transpose %161, [1, 0] : vector<8x16xf32> -> vector<16x8xf32>
    %c0_117 = arith.constant 0 : index
    %c0_118 = arith.constant 0 : index
    %163 = vector.load %arg5[%c0_117, %c0_118] : memref<16x8xf32, #tpu.memory_space<vmem>>, vector<16x8xf32>
    tpu.vector_store %arg5[%c0_117, %c0_118], %162 {strides = array<i32>} : memref<16x8xf32, #tpu.memory_space<vmem>>, vector<16x8xf32>,
    %c0_119 = arith.constant 0 : index
    %c0_120 = arith.constant 0 : index
    %164 = tpu.strided_load %arg5[%c0_119, %c0_120] {strides = array<i32: 2, 1>} : memref<16x8xf32, #tpu.memory_space<vmem>>, vector<8x8xf32>
    %cst_121 = arith.constant 5.000000e-01 : f32
    %165 = vector.broadcast %cst_121 : f32 to vector<8x8xf32>
    %166 = arith.mulf %164, %165 : vector<8x8xf32>
    %c1_122 = arith.constant 1 : index
    %c0_123 = arith.constant 0 : index
    %167 = tpu.strided_load %arg5[%c1_122, %c0_123] {strides = array<i32: 2, 1>} : memref<16x8xf32, #tpu.memory_space<vmem>>, vector<8x8xf32>
    %cst_124 = arith.constant 5.000000e-01 : f32
    %168 = vector.broadcast %cst_124 : f32 to vector<8x8xf32>
    %169 = arith.mulf %167, %168 : vector<8x8xf32>
    %170 = vector.extract_strided_slice %3 {offsets = [3, 0, 0], sizes = [1, 8, 16], strides = [1, 1, 1]} : vector<4x8x16xf32> to vector<1x8x16xf32>
    %171 = vector.shape_cast %170 : vector<1x8x16xf32> to vector<8x16xf32>
    %172 = tpu.transpose %171, [1, 0] : vector<8x16xf32> -> vector<16x8xf32>
    %c0_125 = arith.constant 0 : index
    %c0_126 = arith.constant 0 : index
    %173 = vector.load %arg5[%c0_125, %c0_126] : memref<16x8xf32, #tpu.memory_space<vmem>>, vector<16x8xf32>
    tpu.vector_store %arg5[%c0_125, %c0_126], %172 {strides = array<i32>} : memref<16x8xf32, #tpu.memory_space<vmem>>, vector<16x8xf32>,
    %c0_127 = arith.constant 0 : index
    %c0_128 = arith.constant 0 : index
    %174 = tpu.strided_load %arg5[%c0_127, %c0_128] {strides = array<i32: 2, 1>} : memref<16x8xf32, #tpu.memory_space<vmem>>, vector<8x8xf32>
    %cst_129 = arith.constant 5.000000e-01 : f32
    %175 = vector.broadcast %cst_129 : f32 to vector<8x8xf32>
    %176 = arith.mulf %174, %175 : vector<8x8xf32>
    %c1_130 = arith.constant 1 : index
    %c0_131 = arith.constant 0 : index
    %177 = tpu.strided_load %arg5[%c1_130, %c0_131] {strides = array<i32: 2, 1>} : memref<16x8xf32, #tpu.memory_space<vmem>>, vector<8x8xf32>
    %cst_132 = arith.constant 5.000000e-01 : f32
    %178 = vector.broadcast %cst_132 : f32 to vector<8x8xf32>
    %179 = arith.mulf %177, %178 : vector<8x8xf32>
    %180 = arith.addf %166, %176 : vector<8x8xf32>
    %181 = arith.addf %180, %169 : vector<8x8xf32>
    %182 = arith.addf %181, %179 : vector<8x8xf32>
    %183 = tpu.transpose %182, [1, 0] : vector<8x8xf32> -> vector<8x8xf32>
    %c0_133 = arith.constant 0 : index
    %c0_134 = arith.constant 0 : index
    %c3_135 = arith.constant 3 : index
    %c0_136 = arith.constant 0 : index
    %c0_137 = arith.constant 0 : index
    %184 = vector.load %arg4[%c0_133, %c0_134, %c3_135, %c0_136, %c0_137] : memref<1x4x4x8x8xf32, #tpu.memory_space<vmem>>, vector<1x1x1x8x8xf32>
    %185 = vector.shape_cast %184 : vector<1x1x1x8x8xf32> to vector<8x8xf32>
    %186 = vector.shape_cast %183 : vector<8x8xf32> to vector<1x1x1x8x8xf32>
    tpu.vector_store %arg4[%c0_133, %c0_134, %c3_135, %c0_136, %c0_137], %186 {strides = array<i32>} : memref<1x4x4x8x8xf32, #tpu.memory_space<vmem>>, vector<1x1x1x8x8xf32>,
    %cst_138 = arith.constant 0.000000e+00 : f32
    %187 = vector.broadcast %cst_138 : f32 to vector<8x8xf32>
    %188 = arith.subf %187, %166 : vector<8x8xf32>
    %189 = arith.subf %188, %176 : vector<8x8xf32>
    %190 = arith.addf %189, %169 : vector<8x8xf32>
    %191 = arith.addf %190, %179 : vector<8x8xf32>
    %192 = tpu.transpose %191, [1, 0] : vector<8x8xf32> -> vector<8x8xf32>
    %c0_139 = arith.constant 0 : index
    %c1_140 = arith.constant 1 : index
    %c3_141 = arith.constant 3 : index
    %c0_142 = arith.constant 0 : index
    %c0_143 = arith.constant 0 : index
    %193 = vector.load %arg4[%c0_139, %c1_140, %c3_141, %c0_142, %c0_143] : memref<1x4x4x8x8xf32, #tpu.memory_space<vmem>>, vector<1x1x1x8x8xf32>
    %194 = vector.shape_cast %193 : vector<1x1x1x8x8xf32> to vector<8x8xf32>
    %195 = vector.shape_cast %192 : vector<8x8xf32> to vector<1x1x1x8x8xf32>
    tpu.vector_store %arg4[%c0_139, %c1_140, %c3_141, %c0_142, %c0_143], %195 {strides = array<i32>} : memref<1x4x4x8x8xf32, #tpu.memory_space<vmem>>, vector<1x1x1x8x8xf32>,
    %cst_144 = arith.constant 0.000000e+00 : f32
    %196 = vector.broadcast %cst_144 : f32 to vector<8x8xf32>
    %197 = arith.subf %196, %166 : vector<8x8xf32>
    %198 = arith.addf %197, %176 : vector<8x8xf32>
    %199 = arith.subf %198, %169 : vector<8x8xf32>
    %200 = arith.addf %199, %179 : vector<8x8xf32>
    %201 = tpu.transpose %200, [1, 0] : vector<8x8xf32> -> vector<8x8xf32>
    %c0_145 = arith.constant 0 : index
    %c2_146 = arith.constant 2 : index
    %c3_147 = arith.constant 3 : index
    %c0_148 = arith.constant 0 : index
    %c0_149 = arith.constant 0 : index
    %202 = vector.load %arg4[%c0_145, %c2_146, %c3_147, %c0_148, %c0_149] : memref<1x4x4x8x8xf32, #tpu.memory_space<vmem>>, vector<1x1x1x8x8xf32>
    %203 = vector.shape_cast %202 : vector<1x1x1x8x8xf32> to vector<8x8xf32>
    %204 = vector.shape_cast %201 : vector<8x8xf32> to vector<1x1x1x8x8xf32>
    tpu.vector_store %arg4[%c0_145, %c2_146, %c3_147, %c0_148, %c0_149], %204 {strides = array<i32>} : memref<1x4x4x8x8xf32, #tpu.memory_space<vmem>>, vector<1x1x1x8x8xf32>,
    %205 = arith.subf %166, %176 : vector<8x8xf32>
    %206 = arith.subf %205, %169 : vector<8x8xf32>
    %207 = arith.addf %206, %179 : vector<8x8xf32>
    %208 = tpu.transpose %207, [1, 0] : vector<8x8xf32> -> vector<8x8xf32>
    %c0_150 = arith.constant 0 : index
    %c3_151 = arith.constant 3 : index
    %c3_152 = arith.constant 3 : index
    %c0_153 = arith.constant 0 : index
    %c0_154 = arith.constant 0 : index
    %209 = vector.load %arg4[%c0_150, %c3_151, %c3_152, %c0_153, %c0_154] : memref<1x4x4x8x8xf32, #tpu.memory_space<vmem>>, vector<1x1x1x8x8xf32>
    %210 = vector.shape_cast %209 : vector<1x1x1x8x8xf32> to vector<8x8xf32>
    %211 = vector.shape_cast %208 : vector<8x8xf32> to vector<1x1x1x8x8xf32>
    tpu.vector_store %arg4[%c0_150, %c3_151, %c3_152, %c0_153, %c0_154], %211 {strides = array<i32>} : memref<1x4x4x8x8xf32, #tpu.memory_space<vmem>>, vector<1x1x1x8x8xf32>,
    return
  }
  func.func @transform_0(%arg0: i32, %arg1: i32, %arg2: i32) -> (i32, i32, i32, i32) {
    %c0_i32 = arith.constant 0 : i32
    %c0_i32_0 = arith.constant 0 : i32
    return %arg0, %arg1, %arg2, %c0_i32 : i32, i32, i32, i32
  }
  func.func @transform_1(%arg0: i32, %arg1: i32, %arg2: i32) -> (i32, i32, i32, i32, i32) {
    %c0_i32 = arith.constant 0 : i32
    %c0_i32_0 = arith.constant 0 : i32
    %c0_i32_1 = arith.constant 0 : i32
    return %arg0, %c0_i32, %arg1, %arg2, %c0_i32_0 : i32, i32, i32, i32, i32
  }
}

</mosaic_0001>

<llo_original>
// kernel: tpu_custom_call.1
$region0: #{tpu_custom_call.1}
  #allocation0 [shape = 'u32[]', space=smem, size = 0x4, offset = 0x4, fixed_abs, tag = 'smem constant byte address 0x4 - core index']
  #allocation1 [shape = 'u32[144,128]{1,0:T(1,128)}', space=vmem, size = 0x12000, scoped, tag = 'internal scratch']
  #allocation2 [shape = 'f32[16,8]{1,0:T(8,128)}', space=vmem, size = 0x2000, scoped, tag = 'scratch operand']
  %s0 = inlined_call_operand.hbm [shape: f32[2,4,16,16], index: 0, kind: input, shape index: {}]
  %s1 = inlined_call_operand.hbm [shape: f32[2,4,4,8,8], index: 1, kind: output, shape index: {}]
  %s2 = sld [smem:[#allocation0]]
  $region41: #{tpu_custom_call.1} parent=0
    _
  %s4 = ssub.s32 1, %s2
  %s5 = scalar_select 0, %s4, %s2
  $region1: #{tpu_custom_call.1} parent=0
    #allocation3 [shape = 'u8[65536]{0}', space=vmem, size = 0x10000, scoped, tag = 'input window, operand 0']
    #allocation4 [shape = 's32[2]{0}', space=sflag, size = 0x8, scoped, tag = 'scoped memory for tpu_custom_call.1']
    #allocation5 [shape = 's32[2]{0}', space=sflag, size = 0x8, scoped, tag = 'scoped memory for tpu_custom_call.1']
    #allocation6 [shape = 'u8[131072]{0}', space=vmem, size = 0x20000, scoped, tag = 'output window, operand 0']
    %6 = vsyncpa [#allocation4], 0
    %s7 = scalar_lea.sflag [#allocation4], 1
    %8 = vsyncpa %s7, 0
    %9 = vsyncpa [#allocation5], 0
    %s10 = scalar_lea.sflag [#allocation5], 1
    %11 = vsyncpa %s10, 0
    loop: start=0, step=1, limit=4
    $region2: #{tpu_custom_call.1} parent=1 // loop_pre_header
      _
    $region3: #{tpu_custom_call.1} parent=1 // loop_header
      %s13 = sphi 0, %s17
      %p14 = scmp.ge.s32.totalorder %s13, 4
      %s20 = sphi 0, %s39
      %s21 = sphi 0, %s35
      %s22 = sphi 0, %s31
      %s23 = sphi 0, %s20
      %s24 = sphi 0, %s21
      %s25 = sphi 0, %s22
      %s26 = sphi 0, %s23
      %s27 = sphi 0, %s24
      %s28 = sphi 0, %s25
      %s46 = sphi 0, %s48
      %s49 = sphi 0, %s46
      %s50 = sphi 0, %s49
      %s66 = sphi 0, %s50
      %s76 = sphi 0, %s78
      %s79 = sphi 0, %s76
      %s80 = sphi 0, %s79
      %s96 = sphi 0, %s80
    $region4: #{tpu_custom_call.1} parent=1 // loop_header_branch
      %16 = sbr.rel (%p14) target = $region8
    $region5: #{tpu_custom_call.1} parent=1 // loop_body
      %s18 = ssub.s32 %s13, 1
      %s19 = ssub.s32 %s13, 2
      %s29 = sadd.s32 1, %s22
      %p30 = scmp.ge.s32.totalorder %s29, 1
      %s31 = scalar_select %p30, 0, %s29
      %s32 = sadd.s32 1, %s21
      %s33 = scalar_select %p30, %s32, %s21
      %p34 = scmp.ge.s32.totalorder %s33, 1
      %s35 = scalar_select %p34, 0, %s33
      %s36 = sadd.s32 1, %s20
      %s37 = scalar_select %p34, %s36, %s20
      %p38 = scmp.ge.s32.totalorder %s37, 2
      %s39 = scalar_select %p38, 0, %s37
      %s40 = ssub.s32 %s20, %s39
      %s41 = ssub.s32 %s21, %s35
      %s42 = sor.u32 %s40, %s41
      %s43 = ssub.s32 %s22, %s31
      %s44 = sor.u32 %s42, %s43
      %p45 = scmp.eq.s32.totalorder %s44, 0
      %s47 = sadd.s32 %s46, 1
      %s48 = scalar_select %p45, %s46, %s47
      %p51 = pneg %p45
      %p52 = scmp.eq.s32.totalorder %s13, 1
      %p53 = por %p51, %p52
      %p54 = scmp.ne.s32.totalorder %s46, %s49
      %p55 = scmp.eq.s32.totalorder %s13, 0
      %p56 = por %p54, %p55
      %p57 = scmp.ne.s32.totalorder %s46, %s49
      %p58 = scmp.eq.s32.totalorder %s18, 1
      %p59 = por %p57, %p58
      %p60 = scmp.ne.s32.totalorder %s49, %s50
      %p61 = scmp.eq.s32.totalorder %s18, 0
      %p62 = por %p60, %p61
      %p63 = scmp.ne.s32.totalorder %s49, %s50
      %p64 = scmp.eq.s32.totalorder %s19, 1
      %p65 = por %p63, %p64
      %p67 = scmp.ne.s32.totalorder %s50, %s66
      %p68 = scmp.eq.s32.totalorder %s19, 0
      %p69 = por %p67, %p68
      %s70 = ssub.s32 %s20, %s39
      %s71 = ssub.s32 %s21, %s35
      %s72 = sor.u32 %s70, %s71
      %s73 = ssub.s32 %s22, %s31
      %s74 = sor.u32 %s72, %s73
      %p75 = scmp.eq.s32.totalorder %s74, 0
      %s77 = sadd.s32 %s76, 1
      %s78 = scalar_select %p75, %s76, %s77
      %p81 = pneg %p75
      %p82 = scmp.eq.s32.totalorder %s13, 1
      %p83 = por %p81, %p82
      %p84 = scmp.ne.s32.totalorder %s76, %s79
      %p85 = scmp.eq.s32.totalorder %s13, 0
      %p86 = por %p84, %p85
      %p87 = scmp.ne.s32.totalorder %s76, %s79
      %p88 = scmp.eq.s32.totalorder %s18, 1
      %p89 = por %p87, %p88
      %p90 = scmp.ne.s32.totalorder %s79, %s80
      %p91 = scmp.eq.s32.totalorder %s18, 0
      %p92 = por %p90, %p91
      %p93 = scmp.ne.s32.totalorder %s79, %s80
      %p94 = scmp.eq.s32.totalorder %s19, 1
      %p95 = por %p93, %p94
      %p97 = scmp.ne.s32.totalorder %s80, %s96
      %p98 = scmp.eq.s32.totalorder %s19, 0
      %p99 = por %p97, %p98
      %p100 = scmp.le.s32.totalorder 1, %s13
      %p101 = scmp.lt.s32.totalorder %s13, 3
      %p102 = pnand %p100, %p101
      %p103 = pneg %p102
      // Predicated region
      $region9: #{tpu_custom_call.1} parent=5 // pred_check
        _
      $region10: #{tpu_custom_call.1} parent=5 // pred_check_branch
        %105 = sbr.rel (%p102) target = $region12
      $region11: #{tpu_custom_call.1} parent=5 // pred_region
        %s106 = ssub.s32 %s13, 1
      $region12: #{tpu_custom_call.1} parent=5 // pred_fallthru
        _
      %p107 = scmp.lt.s32.totalorder %s13, 2
      // Predicated region
      $region13: #{tpu_custom_call.1} parent=5 // pred_check
        %p108 = pneg %p107
      $region14: #{tpu_custom_call.1} parent=5 // pred_check_branch
        %110 = sbr.rel (%p108) target = $region16
      $region15: #{tpu_custom_call.1} parent=5 // pred_region
        // Predicated region
        $region17: #{tpu_custom_call.1} parent=15 // pred_check
          %p111 = pneg %p56
        $region18: #{tpu_custom_call.1} parent=15 // pred_check_branch
          %113 = sbr.rel (%p111) target = $region20
        $region19: #{tpu_custom_call.1} parent=15 // pred_region
          %s114 = sand.u32 %s46, 1
          %s115 = scalar_lea.sflag [#allocation4], %s114
          %s116 = sand.u32 %s46, 1
          %s117 = smul.addr %s116, 64
          %s118 = scalar_lea.vmem [#allocation3], %s117
          %s119 = smul.u32 4, %s21
          %s120 = smul.u32 2, %s22
          %s122 = ssub.s32 1024, 1024
          %123 = vsyncadd %s115, %s122
          %s124 = smul.addr %s119, 2
          %s125 = sadd.s32 %s120, %s124
          %s126 = smul.addr %s20, 8
          %s127 = sadd.s32 %s125, %s126
          %s128 = smul.addr %s127, 128
          %s129 = scalar_lea.hbm %s0, %s128
          %s130 = sshll.u32 %s118, 4
          %s131 = int_to_ptr.vmem [resolvable:$true] %s130
          %136 = dma.hbm_to_vmem [thread:$0]  %s129, 1024, %s131, %s115, 128, 128, 8
        $region20: #{tpu_custom_call.1} parent=15 // pred_fallthru
          _
      $region16: #{tpu_custom_call.1} parent=5 // pred_fallthru
        _
      %p137 = scmp.le.s32.totalorder 1, %s13
      %p138 = scmp.lt.s32.totalorder %s13, 3
      %p139 = pnand %p137, %p138
      %p140 = pneg %p139
      // Predicated region
      $region21: #{tpu_custom_call.1} parent=5 // pred_check
        _
      $region22: #{tpu_custom_call.1} parent=5 // pred_check_branch
        %142 = sbr.rel (%p139) target = $region24
      $region23: #{tpu_custom_call.1} parent=5 // pred_region
        %s143 = ssub.s32 %s13, 1
        %s144 = sand.u32 %s49, 1
        %s145 = scalar_lea.sflag [#allocation4], %s144
        %s146 = sand.u32 %s49, 1
        %s147 = smul.addr %s146, 64
        %s148 = scalar_lea.vmem [#allocation3], %s147
        // Predicated region
        $region25: #{tpu_custom_call.1} parent=23 // pred_check
          %p149 = pneg %p62
        $region26: #{tpu_custom_call.1} parent=23 // pred_check_branch
          %151 = sbr.rel (%p149) target = $region28
        $region27: #{tpu_custom_call.1} parent=23 // pred_region
          %152 = dma.done %s145, 1024
        $region28: #{tpu_custom_call.1} parent=23 // pred_fallthru
          _
        %s153 = sand.u32 %s49, 1
        %s154 = scalar_lea.sflag [#allocation4], %s153
        %s155 = sand.u32 %s49, 1
        %s156 = smul.addr %s155, 64
        %s157 = scalar_lea.vmem [#allocation3], %s156
        %p158 = pneg %p62
        %p159 = pneg %p59
        %p160 = pneg %p92
        %p161 = pneg %p89
        %s162 = sand.u32 %s79, 1
        %s163 = scalar_lea.sflag [#allocation5], %s162
        %s164 = sand.u32 %s79, 1
        %s165 = smul.addr %s164, 128
        %s166 = scalar_lea.vmem [#allocation6], %s165
        %s167 = smul.u32 4, %s24
        %s168 = smul.u32 2, %s25
        %s169 = smul.u32 4, %s24
        %v170 = vld [vmem:[%s148] ss:$2 sm:$0xff]
        %s171 = scalar_lea.vmem %s148, 16 [#allocation3]
        %v172 = vld [vmem:[%s171] ss:$2 sm:$0xff]
        %s173 = scalar_lea.vmem %s148, 32 [#allocation3]
        %v174 = vld [vmem:[%s173] ss:$2 sm:$0xff]
        %s175 = scalar_lea.vmem %s148, 48 [#allocation3]
        %v176 = vld [vmem:[%s175] ss:$2 sm:$0xff]
        %s177 = scalar_lea.vmem %s148, 1 [#allocation3]
        %v178 = vld [vmem:[%s177] ss:$2 sm:$0xff]
        %s179 = scalar_lea.vmem %s148, 17 [#allocation3]
        %v180 = vld [vmem:[%s179] ss:$2 sm:$0xff]
        %s181 = scalar_lea.vmem %s148, 33 [#allocation3]
        %v182 = vld [vmem:[%s181] ss:$2 sm:$0xff]
        %s183 = scalar_lea.vmem %s148, 49 [#allocation3]
        %v184 = vld [vmem:[%s183] ss:$2 sm:$0xff]
        %185 = vxpose.xlu0.b32.start [1/16] %v170, 128
        %186 = vxpose.xlu0.b32.cont [2/16] 0.0, 128
        %187 = vxpose.xlu0.b32.cont [3/16] 0.0, 128
        %188 = vxpose.xlu0.b32.cont [4/16] 0.0, 128
        %189 = vxpose.xlu0.b32.cont [5/16] 0.0, 128
        %190 = vxpose.xlu0.b32.cont [6/16] 0.0, 128
        %191 = vxpose.xlu0.b32.cont [7/16] 0.0, 128
        %192 = vxpose.xlu0.b32.cont [8/16] 0.0, 128
        %193 = vxpose.xlu0.b32.cont [9/16] 0.0, 128
        %194 = vxpose.xlu0.b32.cont [10/16] 0.0, 128
        %195 = vxpose.xlu0.b32.cont [11/16] 0.0, 128
        %196 = vxpose.xlu0.b32.cont [12/16] 0.0, 128
        %197 = vxpose.xlu0.b32.cont [13/16] 0.0, 128
        %198 = vxpose.xlu0.b32.cont [14/16] 0.0, 128
        %199 = vxpose.xlu0.b32.cont [15/16] 0.0, 128
        %200 = vxpose.xlu0.b32.end [16/16] 0.0, 128
        %v201 = vpop.trf.xlu0
        %v202 = vpop.trf.xlu0
        %v203 = vpop.trf.xlu0
        %v204 = vpop.trf.xlu0
        %v205 = vpop.trf.xlu0
        %v206 = vpop.trf.xlu0
        %v207 = vpop.trf.xlu0
        %v208 = vpop.trf.xlu0
        %v209 = vpop.trf.xlu0
        %v210 = vpop.trf.xlu0
        %v211 = vpop.trf.xlu0
        %v212 = vpop.trf.xlu0
        %v213 = vpop.trf.xlu0
        %v214 = vpop.trf.xlu0
        %v215 = vpop.trf.xlu0
        %v216 = vpop.trf.xlu0
        %vm217 = vcmask 64512
        %218 = vst.msk [vmem:[#allocation2] sm:$0xff] %vm217, %v201
        %219 = vst.msk [vmem:[#allocation2 + $0x8] sm:$0xff] %vm217, %v202
        %v220 = vld [vmem:[#allocation2] ss:$2 sm:$0xff]
        %v221 = vmul.f32 %v220, 0.5
        %s222 = scalar_lea.vmem [#allocation2], 1
        %v223 = vld [vmem:[%s222] ss:$2 sm:$0xff]
        %v224 = vmul.f32 %v223, 0.5
        %225 = vxpose.xlu0.b32.start [1/16] %v178, 128
        %226 = vxpose.xlu0.b32.cont [2/16] 0.0, 128
        %227 = vxpose.xlu0.b32.cont [3/16] 0.0, 128
        %228 = vxpose.xlu0.b32.cont [4/16] 0.0, 128
        %229 = vxpose.xlu0.b32.cont [5/16] 0.0, 128
        %230 = vxpose.xlu0.b32.cont [6/16] 0.0, 128
        %231 = vxpose.xlu0.b32.cont [7/16] 0.0, 128
        %232 = vxpose.xlu0.b32.cont [8/16] 0.0, 128
        %233 = vxpose.xlu0.b32.cont [9/16] 0.0, 128
        %234 = vxpose.xlu0.b32.cont [10/16] 0.0, 128
        %235 = vxpose.xlu0.b32.cont [11/16] 0.0, 128
        %236 = vxpose.xlu0.b32.cont [12/16] 0.0, 128
        %237 = vxpose.xlu0.b32.cont [13/16] 0.0, 128
        %238 = vxpose.xlu0.b32.cont [14/16] 0.0, 128
        %239 = vxpose.xlu0.b32.cont [15/16] 0.0, 128
        %240 = vxpose.xlu0.b32.end [16/16] 0.0, 128
        %v241 = vpop.trf.xlu0
        %v242 = vpop.trf.xlu0
        %v243 = vpop.trf.xlu0
        %v244 = vpop.trf.xlu0
        %v245 = vpop.trf.xlu0
        %v246 = vpop.trf.xlu0
        %v247 = vpop.trf.xlu0
        %v248 = vpop.trf.xlu0
        %v249 = vpop.trf.xlu0
        %v250 = vpop.trf.xlu0
        %v251 = vpop.trf.xlu0
        %v252 = vpop.trf.xlu0
        %v253 = vpop.trf.xlu0
        %v254 = vpop.trf.xlu0
        %v255 = vpop.trf.xlu0
        %v256 = vpop.trf.xlu0
        %257 = vst.msk [vmem:[#allocation2] sm:$0xff] %vm217, %v241
        %258 = vst.msk [vmem:[#allocation2 + $0x8] sm:$0xff] %vm217, %v242
        %v259 = vld [vmem:[#allocation2] ss:$2 sm:$0xff]
        %v260 = vmul.f32 %v259, 0.5
        %v261 = vld [vmem:[%s222] ss:$2 sm:$0xff]
        %v262 = vmul.f32 %v261, 0.5
        %v263 = vadd.f32 %v221, %v260
        %v264 = vadd.f32 %v263, %v224
        %v265 = vadd.f32 %v264, %v262
        %266 = vxpose.xlu0.b32.start [1/16] %v265, 128
        %267 = vxpose.xlu0.b32.cont [2/16] 0.0, 128
        %268 = vxpose.xlu0.b32.cont [3/16] 0.0, 128
        %269 = vxpose.xlu0.b32.cont [4/16] 0.0, 128
        %270 = vxpose.xlu0.b32.cont [5/16] 0.0, 128
        %271 = vxpose.xlu0.b32.cont [6/16] 0.0, 128
        %272 = vxpose.xlu0.b32.cont [7/16] 0.0, 128
        %273 = vxpose.xlu0.b32.cont [8/16] 0.0, 128
        %274 = vxpose.xlu0.b32.cont [9/16] 0.0, 128
        %275 = vxpose.xlu0.b32.cont [10/16] 0.0, 128
        %276 = vxpose.xlu0.b32.cont [11/16] 0.0, 128
        %277 = vxpose.xlu0.b32.cont [12/16] 0.0, 128
        %278 = vxpose.xlu0.b32.cont [13/16] 0.0, 128
        %279 = vxpose.xlu0.b32.cont [14/16] 0.0, 128
        %280 = vxpose.xlu0.b32.cont [15/16] 0.0, 128
        %281 = vxpose.xlu0.b32.end [16/16] 0.0, 128
        %v282 = vpop.trf.xlu0
        %v283 = vpop.trf.xlu0
        %v284 = vpop.trf.xlu0
        %v285 = vpop.trf.xlu0
        %v286 = vpop.trf.xlu0
        %v287 = vpop.trf.xlu0
        %v288 = vpop.trf.xlu0
        %v289 = vpop.trf.xlu0
        %v290 = vpop.trf.xlu0
        %v291 = vpop.trf.xlu0
        %v292 = vpop.trf.xlu0
        %v293 = vpop.trf.xlu0
        %v294 = vpop.trf.xlu0
        %v295 = vpop.trf.xlu0
        %v296 = vpop.trf.xlu0
        %v297 = vpop.trf.xlu0
        %298 = vst.msk [vmem:[%s166] sm:$0xff] %vm217, %v282
        %v299 = vsub.f32 0.0, %v221
        %v300 = vsub.f32 %v299, %v260
        %v301 = vadd.f32 %v300, %v224
        %v302 = vadd.f32 %v301, %v262
        %303 = vxpose.xlu0.b32.start [1/16] %v302, 128
        %304 = vxpose.xlu0.b32.cont [2/16] 0.0, 128
        %305 = vxpose.xlu0.b32.cont [3/16] 0.0, 128
        %306 = vxpose.xlu0.b32.cont [4/16] 0.0, 128
        %307 = vxpose.xlu0.b32.cont [5/16] 0.0, 128
        %308 = vxpose.xlu0.b32.cont [6/16] 0.0, 128
        %309 = vxpose.xlu0.b32.cont [7/16] 0.0, 128
        %310 = vxpose.xlu0.b32.cont [8/16] 0.0, 128
        %311 = vxpose.xlu0.b32.cont [9/16] 0.0, 128
        %312 = vxpose.xlu0.b32.cont [10/16] 0.0, 128
        %313 = vxpose.xlu0.b32.cont [11/16] 0.0, 128
        %314 = vxpose.xlu0.b32.cont [12/16] 0.0, 128
        %315 = vxpose.xlu0.b32.cont [13/16] 0.0, 128
        %316 = vxpose.xlu0.b32.cont [14/16] 0.0, 128
        %317 = vxpose.xlu0.b32.cont [15/16] 0.0, 128
        %318 = vxpose.xlu0.b32.end [16/16] 0.0, 128
        %v319 = vpop.trf.xlu0
        %v320 = vpop.trf.xlu0
        %v321 = vpop.trf.xlu0
        %v322 = vpop.trf.xlu0
        %v323 = vpop.trf.xlu0
        %v324 = vpop.trf.xlu0
        %v325 = vpop.trf.xlu0
        %v326 = vpop.trf.xlu0
        %v327 = vpop.trf.xlu0
        %v328 = vpop.trf.xlu0
        %v329 = vpop.trf.xlu0
        %v330 = vpop.trf.xlu0
        %v331 = vpop.trf.xlu0
        %v332 = vpop.trf.xlu0
        %v333 = vpop.trf.xlu0
        %v334 = vpop.trf.xlu0
        %s335 = scalar_lea.vmem %s166, 32 [#allocation6]
        %336 = vst.msk [vmem:[%s335] sm:$0xff] %vm217, %v319
        %v337 = vadd.f32 %v299, %v260
        %v338 = vsub.f32 %v337, %v224
        %v339 = vadd.f32 %v338, %v262
        %340 = vxpose.xlu0.b32.start [1/16] %v339, 128
        %341 = vxpose.xlu0.b32.cont [2/16] 0.0, 128
        %342 = vxpose.xlu0.b32.cont [3/16] 0.0, 128
        %343 = vxpose.xlu0.b32.cont [4/16] 0.0, 128
        %344 = vxpose.xlu0.b32.cont [5/16] 0.0, 128
        %345 = vxpose.xlu0.b32.cont [6/16] 0.0, 128
        %346 = vxpose.xlu0.b32.cont [7/16] 0.0, 128
        %347 = vxpose.xlu0.b32.cont [8/16] 0.0, 128
        %348 = vxpose.xlu0.b32.cont [9/16] 0.0, 128
        %349 = vxpose.xlu0.b32.cont [10/16] 0.0, 128
        %350 = vxpose.xlu0.b32.cont [11/16] 0.0, 128
        %351 = vxpose.xlu0.b32.cont [12/16] 0.0, 128
        %352 = vxpose.xlu0.b32.cont [13/16] 0.0, 128
        %353 = vxpose.xlu0.b32.cont [14/16] 0.0, 128
        %354 = vxpose.xlu0.b32.cont [15/16] 0.0, 128
        %355 = vxpose.xlu0.b32.end [16/16] 0.0, 128
        %v356 = vpop.trf.xlu0
        %v357 = vpop.trf.xlu0
        %v358 = vpop.trf.xlu0
        %v359 = vpop.trf.xlu0
        %v360 = vpop.trf.xlu0
        %v361 = vpop.trf.xlu0
        %v362 = vpop.trf.xlu0
        %v363 = vpop.trf.xlu0
        %v364 = vpop.trf.xlu0
        %v365 = vpop.trf.xlu0
        %v366 = vpop.trf.xlu0
        %v367 = vpop.trf.xlu0
        %v368 = vpop.trf.xlu0
        %v369 = vpop.trf.xlu0
        %v370 = vpop.trf.xlu0
        %v371 = vpop.trf.xlu0
        %s372 = scalar_lea.vmem %s166, 64 [#allocation6]
        %373 = vst.msk [vmem:[%s372] sm:$0xff] %vm217, %v356
        %v374 = vsub.f32 %v221, %v260
        %v375 = vsub.f32 %v374, %v224
        %v376 = vadd.f32 %v375, %v262
        %377 = vxpose.xlu0.b32.start [1/16] %v376, 128
        %378 = vxpose.xlu0.b32.cont [2/16] 0.0, 128
        %379 = vxpose.xlu0.b32.cont [3/16] 0.0, 128
        %380 = vxpose.xlu0.b32.cont [4/16] 0.0, 128
        %381 = vxpose.xlu0.b32.cont [5/16] 0.0, 128
        %382 = vxpose.xlu0.b32.cont [6/16] 0.0, 128
        %383 = vxpose.xlu0.b32.cont [7/16] 0.0, 128
        %384 = vxpose.xlu0.b32.cont [8/16] 0.0, 128
        %385 = vxpose.xlu0.b32.cont [9/16] 0.0, 128
        %386 = vxpose.xlu0.b32.cont [10/16] 0.0, 128
        %387 = vxpose.xlu0.b32.cont [11/16] 0.0, 128
        %388 = vxpose.xlu0.b32.cont [12/16] 0.0, 128
        %389 = vxpose.xlu0.b32.cont [13/16] 0.0, 128
        %390 = vxpose.xlu0.b32.cont [14/16] 0.0, 128
        %391 = vxpose.xlu0.b32.cont [15/16] 0.0, 128
        %392 = vxpose.xlu0.b32.end [16/16] 0.0, 128
        %v393 = vpop.trf.xlu0
        %v394 = vpop.trf.xlu0
        %v395 = vpop.trf.xlu0
        %v396 = vpop.trf.xlu0
        %v397 = vpop.trf.xlu0
        %v398 = vpop.trf.xlu0
        %v399 = vpop.trf.xlu0
        %v400 = vpop.trf.xlu0
        %v401 = vpop.trf.xlu0
        %v402 = vpop.trf.xlu0
        %v403 = vpop.trf.xlu0
        %v404 = vpop.trf.xlu0
        %v405 = vpop.trf.xlu0
        %v406 = vpop.trf.xlu0
        %v407 = vpop.trf.xlu0
        %v408 = vpop.trf.xlu0
        %s409 = scalar_lea.vmem %s166, 96 [#allocation6]
        %410 = vst.msk [vmem:[%s409] sm:$0xff] %vm217, %v393
        %411 = vxpose.xlu0.b32.start [1/16] %v172, 128
        %412 = vxpose.xlu0.b32.cont [2/16] 0.0, 128
        %413 = vxpose.xlu0.b32.cont [3/16] 0.0, 128
        %414 = vxpose.xlu0.b32.cont [4/16] 0.0, 128
        %415 = vxpose.xlu0.b32.cont [5/16] 0.0, 128
        %416 = vxpose.xlu0.b32.cont [6/16] 0.0, 128
        %417 = vxpose.xlu0.b32.cont [7/16] 0.0, 128
        %418 = vxpose.xlu0.b32.cont [8/16] 0.0, 128
        %419 = vxpose.xlu0.b32.cont [9/16] 0.0, 128
        %420 = vxpose.xlu0.b32.cont [10/16] 0.0, 128
        %421 = vxpose.xlu0.b32.cont [11/16] 0.0, 128
        %422 = vxpose.xlu0.b32.cont [12/16] 0.0, 128
        %423 = vxpose.xlu0.b32.cont [13/16] 0.0, 128
        %424 = vxpose.xlu0.b32.cont [14/16] 0.0, 128
        %425 = vxpose.xlu0.b32.cont [15/16] 0.0, 128
        %426 = vxpose.xlu0.b32.end [16/16] 0.0, 128
        %v427 = vpop.trf.xlu0
        %v428 = vpop.trf.xlu0
        %v429 = vpop.trf.xlu0
        %v430 = vpop.trf.xlu0
        %v431 = vpop.trf.xlu0
        %v432 = vpop.trf.xlu0
        %v433 = vpop.trf.xlu0
        %v434 = vpop.trf.xlu0
        %v435 = vpop.trf.xlu0
        %v436 = vpop.trf.xlu0
        %v437 = vpop.trf.xlu0
        %v438 = vpop.trf.xlu0
        %v439 = vpop.trf.xlu0
        %v440 = vpop.trf.xlu0
        %v441 = vpop.trf.xlu0
        %v442 = vpop.trf.xlu0
        %443 = vst.msk [vmem:[#allocation2] sm:$0xff] %vm217, %v427
        %444 = vst.msk [vmem:[#allocation2 + $0x8] sm:$0xff] %vm217, %v428
        %v445 = vld [vmem:[#allocation2] ss:$2 sm:$0xff]
        %v446 = vmul.f32 %v445, 0.5
        %v447 = vld [vmem:[%s222] ss:$2 sm:$0xff]
        %v448 = vmul.f32 %v447, 0.5
        %449 = vxpose.xlu0.b32.start [1/16] %v180, 128
        %450 = vxpose.xlu0.b32.cont [2/16] 0.0, 128
        %451 = vxpose.xlu0.b32.cont [3/16] 0.0, 128
        %452 = vxpose.xlu0.b32.cont [4/16] 0.0, 128
        %453 = vxpose.xlu0.b32.cont [5/16] 0.0, 128
        %454 = vxpose.xlu0.b32.cont [6/16] 0.0, 128
        %455 = vxpose.xlu0.b32.cont [7/16] 0.0, 128
        %456 = vxpose.xlu0.b32.cont [8/16] 0.0, 128
        %457 = vxpose.xlu0.b32.cont [9/16] 0.0, 128
        %458 = vxpose.xlu0.b32.cont [10/16] 0.0, 128
        %459 = vxpose.xlu0.b32.cont [11/16] 0.0, 128
        %460 = vxpose.xlu0.b32.cont [12/16] 0.0, 128
        %461 = vxpose.xlu0.b32.cont [13/16] 0.0, 128
        %462 = vxpose.xlu0.b32.cont [14/16] 0.0, 128
        %463 = vxpose.xlu0.b32.cont [15/16] 0.0, 128
        %464 = vxpose.xlu0.b32.end [16/16] 0.0, 128
        %v465 = vpop.trf.xlu0
        %v466 = vpop.trf.xlu0
        %v467 = vpop.trf.xlu0
        %v468 = vpop.trf.xlu0
        %v469 = vpop.trf.xlu0
        %v470 = vpop.trf.xlu0
        %v471 = vpop.trf.xlu0
        %v472 = vpop.trf.xlu0
        %v473 = vpop.trf.xlu0
        %v474 = vpop.trf.xlu0
        %v475 = vpop.trf.xlu0
        %v476 = vpop.trf.xlu0
        %v477 = vpop.trf.xlu0
        %v478 = vpop.trf.xlu0
        %v479 = vpop.trf.xlu0
        %v480 = vpop.trf.xlu0
        %481 = vst.msk [vmem:[#allocation2] sm:$0xff] %vm217, %v465
        %482 = vst.msk [vmem:[#allocation2 + $0x8] sm:$0xff] %vm217, %v466
        %v483 = vld [vmem:[#allocation2] ss:$2 sm:$0xff]
        %v484 = vmul.f32 %v483, 0.5
        %v485 = vld [vmem:[%s222] ss:$2 sm:$0xff]
        %v486 = vmul.f32 %v485, 0.5
        %v487 = vadd.f32 %v446, %v484
        %v488 = vadd.f32 %v487, %v448
        %v489 = vadd.f32 %v488, %v486
        %490 = vxpose.xlu0.b32.start [1/16] %v489, 128
        %491 = vxpose.xlu0.b32.cont [2/16] 0.0, 128
        %492 = vxpose.xlu0.b32.cont [3/16] 0.0, 128
        %493 = vxpose.xlu0.b32.cont [4/16] 0.0, 128
        %494 = vxpose.xlu0.b32.cont [5/16] 0.0, 128
        %495 = vxpose.xlu0.b32.cont [6/16] 0.0, 128
        %496 = vxpose.xlu0.b32.cont [7/16] 0.0, 128
        %497 = vxpose.xlu0.b32.cont [8/16] 0.0, 128
        %498 = vxpose.xlu0.b32.cont [9/16] 0.0, 128
        %499 = vxpose.xlu0.b32.cont [10/16] 0.0, 128
        %500 = vxpose.xlu0.b32.cont [11/16] 0.0, 128
        %501 = vxpose.xlu0.b32.cont [12/16] 0.0, 128
        %502 = vxpose.xlu0.b32.cont [13/16] 0.0, 128
        %503 = vxpose.xlu0.b32.cont [14/16] 0.0, 128
        %504 = vxpose.xlu0.b32.cont [15/16] 0.0, 128
        %505 = vxpose.xlu0.b32.end [16/16] 0.0, 128
        %v506 = vpop.trf.xlu0
        %v507 = vpop.trf.xlu0
        %v508 = vpop.trf.xlu0
        %v509 = vpop.trf.xlu0
        %v510 = vpop.trf.xlu0
        %v511 = vpop.trf.xlu0
        %v512 = vpop.trf.xlu0
        %v513 = vpop.trf.xlu0
        %v514 = vpop.trf.xlu0
        %v515 = vpop.trf.xlu0
        %v516 = vpop.trf.xlu0
        %v517 = vpop.trf.xlu0
        %v518 = vpop.trf.xlu0
        %v519 = vpop.trf.xlu0
        %v520 = vpop.trf.xlu0
        %v521 = vpop.trf.xlu0
        %s522 = scalar_lea.vmem %s166, 8 [#allocation6]
        %523 = vst.msk [vmem:[%s522] sm:$0xff] %vm217, %v506
        %v524 = vsub.f32 0.0, %v446
        %v525 = vsub.f32 %v524, %v484
        %v526 = vadd.f32 %v525, %v448
        %v527 = vadd.f32 %v526, %v486
        %528 = vxpose.xlu0.b32.start [1/16] %v527, 128
        %529 = vxpose.xlu0.b32.cont [2/16] 0.0, 128
        %530 = vxpose.xlu0.b32.cont [3/16] 0.0, 128
        %531 = vxpose.xlu0.b32.cont [4/16] 0.0, 128
        %532 = vxpose.xlu0.b32.cont [5/16] 0.0, 128
        %533 = vxpose.xlu0.b32.cont [6/16] 0.0, 128
        %534 = vxpose.xlu0.b32.cont [7/16] 0.0, 128
        %535 = vxpose.xlu0.b32.cont [8/16] 0.0, 128
        %536 = vxpose.xlu0.b32.cont [9/16] 0.0, 128
        %537 = vxpose.xlu0.b32.cont [10/16] 0.0, 128
        %538 = vxpose.xlu0.b32.cont [11/16] 0.0, 128
        %539 = vxpose.xlu0.b32.cont [12/16] 0.0, 128
        %540 = vxpose.xlu0.b32.cont [13/16] 0.0, 128
        %541 = vxpose.xlu0.b32.cont [14/16] 0.0, 128
        %542 = vxpose.xlu0.b32.cont [15/16] 0.0, 128
        %543 = vxpose.xlu0.b32.end [16/16] 0.0, 128
        %v544 = vpop.trf.xlu0
        %v545 = vpop.trf.xlu0
        %v546 = vpop.trf.xlu0
        %v547 = vpop.trf.xlu0
        %v548 = vpop.trf.xlu0
        %v549 = vpop.trf.xlu0
        %v550 = vpop.trf.xlu0
        %v551 = vpop.trf.xlu0
        %v552 = vpop.trf.xlu0
        %v553 = vpop.trf.xlu0
        %v554 = vpop.trf.xlu0
        %v555 = vpop.trf.xlu0
        %v556 = vpop.trf.xlu0
        %v557 = vpop.trf.xlu0
        %v558 = vpop.trf.xlu0
        %v559 = vpop.trf.xlu0
        %s560 = scalar_lea.vmem %s166, 40 [#allocation6]
        %561 = vst.msk [vmem:[%s560] sm:$0xff] %vm217, %v544
        %v562 = vadd.f32 %v524, %v484
        %v563 = vsub.f32 %v562, %v448
        %v564 = vadd.f32 %v563, %v486
        %565 = vxpose.xlu0.b32.start [1/16] %v564, 128
        %566 = vxpose.xlu0.b32.cont [2/16] 0.0, 128
        %567 = vxpose.xlu0.b32.cont [3/16] 0.0, 128
        %568 = vxpose.xlu0.b32.cont [4/16] 0.0, 128
        %569 = vxpose.xlu0.b32.cont [5/16] 0.0, 128
        %570 = vxpose.xlu0.b32.cont [6/16] 0.0, 128
        %571 = vxpose.xlu0.b32.cont [7/16] 0.0, 128
        %572 = vxpose.xlu0.b32.cont [8/16] 0.0, 128
        %573 = vxpose.xlu0.b32.cont [9/16] 0.0, 128
        %574 = vxpose.xlu0.b32.cont [10/16] 0.0, 128
        %575 = vxpose.xlu0.b32.cont [11/16] 0.0, 128
        %576 = vxpose.xlu0.b32.cont [12/16] 0.0, 128
        %577 = vxpose.xlu0.b32.cont [13/16] 0.0, 128
        %578 = vxpose.xlu0.b32.cont [14/16] 0.0, 128
        %579 = vxpose.xlu0.b32.cont [15/16] 0.0, 128
        %580 = vxpose.xlu0.b32.end [16/16] 0.0, 128
        %v581 = vpop.trf.xlu0
        %v582 = vpop.trf.xlu0
        %v583 = vpop.trf.xlu0
        %v584 = vpop.trf.xlu0
        %v585 = vpop.trf.xlu0
        %v586 = vpop.trf.xlu0
        %v587 = vpop.trf.xlu0
        %v588 = vpop.trf.xlu0
        %v589 = vpop.trf.xlu0
        %v590 = vpop.trf.xlu0
        %v591 = vpop.trf.xlu0
        %v592 = vpop.trf.xlu0
        %v593 = vpop.trf.xlu0
        %v594 = vpop.trf.xlu0
        %v595 = vpop.trf.xlu0
        %v596 = vpop.trf.xlu0
        %s597 = scalar_lea.vmem %s166, 72 [#allocation6]
        %598 = vst.msk [vmem:[%s597] sm:$0xff] %vm217, %v581
        %v599 = vsub.f32 %v446, %v484
        %v600 = vsub.f32 %v599, %v448
        %v601 = vadd.f32 %v600, %v486
        %602 = vxpose.xlu0.b32.start [1/16] %v601, 128
        %603 = vxpose.xlu0.b32.cont [2/16] 0.0, 128
        %604 = vxpose.xlu0.b32.cont [3/16] 0.0, 128
        %605 = vxpose.xlu0.b32.cont [4/16] 0.0, 128
        %606 = vxpose.xlu0.b32.cont [5/16] 0.0, 128
        %607 = vxpose.xlu0.b32.cont [6/16] 0.0, 128
        %608 = vxpose.xlu0.b32.cont [7/16] 0.0, 128
        %609 = vxpose.xlu0.b32.cont [8/16] 0.0, 128
        %610 = vxpose.xlu0.b32.cont [9/16] 0.0, 128
        %611 = vxpose.xlu0.b32.cont [10/16] 0.0, 128
        %612 = vxpose.xlu0.b32.cont [11/16] 0.0, 128
        %613 = vxpose.xlu0.b32.cont [12/16] 0.0, 128
        %614 = vxpose.xlu0.b32.cont [13/16] 0.0, 128
        %615 = vxpose.xlu0.b32.cont [14/16] 0.0, 128
        %616 = vxpose.xlu0.b32.cont [15/16] 0.0, 128
        %617 = vxpose.xlu0.b32.end [16/16] 0.0, 128
        %v618 = vpop.trf.xlu0
        %v619 = vpop.trf.xlu0
        %v620 = vpop.trf.xlu0
        %v621 = vpop.trf.xlu0
        %v622 = vpop.trf.xlu0
        %v623 = vpop.trf.xlu0
        %v624 = vpop.trf.xlu0
        %v625 = vpop.trf.xlu0
        %v626 = vpop.trf.xlu0
        %v627 = vpop.trf.xlu0
        %v628 = vpop.trf.xlu0
        %v629 = vpop.trf.xlu0
        %v630 = vpop.trf.xlu0
        %v631 = vpop.trf.xlu0
        %v632 = vpop.trf.xlu0
        %v633 = vpop.trf.xlu0
        %s634 = scalar_lea.vmem %s166, 104 [#allocation6]
        %635 = vst.msk [vmem:[%s634] sm:$0xff] %vm217, %v618
        %636 = vxpose.xlu0.b32.start [1/16] %v174, 128
        %637 = vxpose.xlu0.b32.cont [2/16] 0.0, 128
        %638 = vxpose.xlu0.b32.cont [3/16] 0.0, 128
        %639 = vxpose.xlu0.b32.cont [4/16] 0.0, 128
        %640 = vxpose.xlu0.b32.cont [5/16] 0.0, 128
        %641 = vxpose.xlu0.b32.cont [6/16] 0.0, 128
        %642 = vxpose.xlu0.b32.cont [7/16] 0.0, 128
        %643 = vxpose.xlu0.b32.cont [8/16] 0.0, 128
        %644 = vxpose.xlu0.b32.cont [9/16] 0.0, 128
        %645 = vxpose.xlu0.b32.cont [10/16] 0.0, 128
        %646 = vxpose.xlu0.b32.cont [11/16] 0.0, 128
        %647 = vxpose.xlu0.b32.cont [12/16] 0.0, 128
        %648 = vxpose.xlu0.b32.cont [13/16] 0.0, 128
        %649 = vxpose.xlu0.b32.cont [14/16] 0.0, 128
        %650 = vxpose.xlu0.b32.cont [15/16] 0.0, 128
        %651 = vxpose.xlu0.b32.end [16/16] 0.0, 128
        %v652 = vpop.trf.xlu0
        %v653 = vpop.trf.xlu0
        %v654 = vpop.trf.xlu0
        %v655 = vpop.trf.xlu0
        %v656 = vpop.trf.xlu0
        %v657 = vpop.trf.xlu0
        %v658 = vpop.trf.xlu0
        %v659 = vpop.trf.xlu0
        %v660 = vpop.trf.xlu0
        %v661 = vpop.trf.xlu0
        %v662 = vpop.trf.xlu0
        %v663 = vpop.trf.xlu0
        %v664 = vpop.trf.xlu0
        %v665 = vpop.trf.xlu0
        %v666 = vpop.trf.xlu0
        %v667 = vpop.trf.xlu0
        %668 = vst.msk [vmem:[#allocation2] sm:$0xff] %vm217, %v652
        %669 = vst.msk [vmem:[#allocation2 + $0x8] sm:$0xff] %vm217, %v653
        %v670 = vld [vmem:[#allocation2] ss:$2 sm:$0xff]
        %v671 = vmul.f32 %v670, 0.5
        %v672 = vld [vmem:[%s222] ss:$2 sm:$0xff]
        %v673 = vmul.f32 %v672, 0.5
        %674 = vxpose.xlu0.b32.start [1/16] %v182, 128
        %675 = vxpose.xlu0.b32.cont [2/16] 0.0, 128
        %676 = vxpose.xlu0.b32.cont [3/16] 0.0, 128
        %677 = vxpose.xlu0.b32.cont [4/16] 0.0, 128
        %678 = vxpose.xlu0.b32.cont [5/16] 0.0, 128
        %679 = vxpose.xlu0.b32.cont [6/16] 0.0, 128
        %680 = vxpose.xlu0.b32.cont [7/16] 0.0, 128
        %681 = vxpose.xlu0.b32.cont [8/16] 0.0, 128
        %682 = vxpose.xlu0.b32.cont [9/16] 0.0, 128
        %683 = vxpose.xlu0.b32.cont [10/16] 0.0, 128
        %684 = vxpose.xlu0.b32.cont [11/16] 0.0, 128
        %685 = vxpose.xlu0.b32.cont [12/16] 0.0, 128
        %686 = vxpose.xlu0.b32.cont [13/16] 0.0, 128
        %687 = vxpose.xlu0.b32.cont [14/16] 0.0, 128
        %688 = vxpose.xlu0.b32.cont [15/16] 0.0, 128
        %689 = vxpose.xlu0.b32.end [16/16] 0.0, 128
        %v690 = vpop.trf.xlu0
        %v691 = vpop.trf.xlu0
        %v692 = vpop.trf.xlu0
        %v693 = vpop.trf.xlu0
        %v694 = vpop.trf.xlu0
        %v695 = vpop.trf.xlu0
        %v696 = vpop.trf.xlu0
        %v697 = vpop.trf.xlu0
        %v698 = vpop.trf.xlu0
        %v699 = vpop.trf.xlu0
        %v700 = vpop.trf.xlu0
        %v701 = vpop.trf.xlu0
        %v702 = vpop.trf.xlu0
        %v703 = vpop.trf.xlu0
        %v704 = vpop.trf.xlu0
        %v705 = vpop.trf.xlu0
        %706 = vst.msk [vmem:[#allocation2] sm:$0xff] %vm217, %v690
        %707 = vst.msk [vmem:[#allocation2 + $0x8] sm:$0xff] %vm217, %v691
        %v708 = vld [vmem:[#allocation2] ss:$2 sm:$0xff]
        %v709 = vmul.f32 %v708, 0.5
        %v710 = vld [vmem:[%s222] ss:$2 sm:$0xff]
        %v711 = vmul.f32 %v710, 0.5
        %v712 = vadd.f32 %v671, %v709
        %v713 = vadd.f32 %v712, %v673
        %v714 = vadd.f32 %v713, %v711
        %715 = vxpose.xlu0.b32.start [1/16] %v714, 128
        %716 = vxpose.xlu0.b32.cont [2/16] 0.0, 128
        %717 = vxpose.xlu0.b32.cont [3/16] 0.0, 128
        %718 = vxpose.xlu0.b32.cont [4/16] 0.0, 128
        %719 = vxpose.xlu0.b32.cont [5/16] 0.0, 128
        %720 = vxpose.xlu0.b32.cont [6/16] 0.0, 128
        %721 = vxpose.xlu0.b32.cont [7/16] 0.0, 128
        %722 = vxpose.xlu0.b32.cont [8/16] 0.0, 128
        %723 = vxpose.xlu0.b32.cont [9/16] 0.0, 128
        %724 = vxpose.xlu0.b32.cont [10/16] 0.0, 128
        %725 = vxpose.xlu0.b32.cont [11/16] 0.0, 128
        %726 = vxpose.xlu0.b32.cont [12/16] 0.0, 128
        %727 = vxpose.xlu0.b32.cont [13/16] 0.0, 128
        %728 = vxpose.xlu0.b32.cont [14/16] 0.0, 128
        %729 = vxpose.xlu0.b32.cont [15/16] 0.0, 128
        %730 = vxpose.xlu0.b32.end [16/16] 0.0, 128
        %v731 = vpop.trf.xlu0
        %v732 = vpop.trf.xlu0
        %v733 = vpop.trf.xlu0
        %v734 = vpop.trf.xlu0
        %v735 = vpop.trf.xlu0
        %v736 = vpop.trf.xlu0
        %v737 = vpop.trf.xlu0
        %v738 = vpop.trf.xlu0
        %v739 = vpop.trf.xlu0
        %v740 = vpop.trf.xlu0
        %v741 = vpop.trf.xlu0
        %v742 = vpop.trf.xlu0
        %v743 = vpop.trf.xlu0
        %v744 = vpop.trf.xlu0
        %v745 = vpop.trf.xlu0
        %v746 = vpop.trf.xlu0
        %s747 = scalar_lea.vmem %s166, 16 [#allocation6]
        %748 = vst.msk [vmem:[%s747] sm:$0xff] %vm217, %v731
        %v749 = vsub.f32 0.0, %v671
        %v750 = vsub.f32 %v749, %v709
        %v751 = vadd.f32 %v750, %v673
        %v752 = vadd.f32 %v751, %v711
        %753 = vxpose.xlu0.b32.start [1/16] %v752, 128
        %754 = vxpose.xlu0.b32.cont [2/16] 0.0, 128
        %755 = vxpose.xlu0.b32.cont [3/16] 0.0, 128
        %756 = vxpose.xlu0.b32.cont [4/16] 0.0, 128
        %757 = vxpose.xlu0.b32.cont [5/16] 0.0, 128
        %758 = vxpose.xlu0.b32.cont [6/16] 0.0, 128
        %759 = vxpose.xlu0.b32.cont [7/16] 0.0, 128
        %760 = vxpose.xlu0.b32.cont [8/16] 0.0, 128
        %761 = vxpose.xlu0.b32.cont [9/16] 0.0, 128
        %762 = vxpose.xlu0.b32.cont [10/16] 0.0, 128
        %763 = vxpose.xlu0.b32.cont [11/16] 0.0, 128
        %764 = vxpose.xlu0.b32.cont [12/16] 0.0, 128
        %765 = vxpose.xlu0.b32.cont [13/16] 0.0, 128
        %766 = vxpose.xlu0.b32.cont [14/16] 0.0, 128
        %767 = vxpose.xlu0.b32.cont [15/16] 0.0, 128
        %768 = vxpose.xlu0.b32.end [16/16] 0.0, 128
        %v769 = vpop.trf.xlu0
        %v770 = vpop.trf.xlu0
        %v771 = vpop.trf.xlu0
        %v772 = vpop.trf.xlu0
        %v773 = vpop.trf.xlu0
        %v774 = vpop.trf.xlu0
        %v775 = vpop.trf.xlu0
        %v776 = vpop.trf.xlu0
        %v777 = vpop.trf.xlu0
        %v778 = vpop.trf.xlu0
        %v779 = vpop.trf.xlu0
        %v780 = vpop.trf.xlu0
        %v781 = vpop.trf.xlu0
        %v782 = vpop.trf.xlu0
        %v783 = vpop.trf.xlu0
        %v784 = vpop.trf.xlu0
        %s785 = scalar_lea.vmem %s166, 48 [#allocation6]
        %786 = vst.msk [vmem:[%s785] sm:$0xff] %vm217, %v769
        %v787 = vadd.f32 %v749, %v709
        %v788 = vsub.f32 %v787, %v673
        %v789 = vadd.f32 %v788, %v711
        %790 = vxpose.xlu0.b32.start [1/16] %v789, 128
        %791 = vxpose.xlu0.b32.cont [2/16] 0.0, 128
        %792 = vxpose.xlu0.b32.cont [3/16] 0.0, 128
        %793 = vxpose.xlu0.b32.cont [4/16] 0.0, 128
        %794 = vxpose.xlu0.b32.cont [5/16] 0.0, 128
        %795 = vxpose.xlu0.b32.cont [6/16] 0.0, 128
        %796 = vxpose.xlu0.b32.cont [7/16] 0.0, 128
        %797 = vxpose.xlu0.b32.cont [8/16] 0.0, 128
        %798 = vxpose.xlu0.b32.cont [9/16] 0.0, 128
        %799 = vxpose.xlu0.b32.cont [10/16] 0.0, 128
        %800 = vxpose.xlu0.b32.cont [11/16] 0.0, 128
        %801 = vxpose.xlu0.b32.cont [12/16] 0.0, 128
        %802 = vxpose.xlu0.b32.cont [13/16] 0.0, 128
        %803 = vxpose.xlu0.b32.cont [14/16] 0.0, 128
        %804 = vxpose.xlu0.b32.cont [15/16] 0.0, 128
        %805 = vxpose.xlu0.b32.end [16/16] 0.0, 128
        %v806 = vpop.trf.xlu0
        %v807 = vpop.trf.xlu0
        %v808 = vpop.trf.xlu0
        %v809 = vpop.trf.xlu0
        %v810 = vpop.trf.xlu0
        %v811 = vpop.trf.xlu0
        %v812 = vpop.trf.xlu0
        %v813 = vpop.trf.xlu0
        %v814 = vpop.trf.xlu0
        %v815 = vpop.trf.xlu0
        %v816 = vpop.trf.xlu0
        %v817 = vpop.trf.xlu0
        %v818 = vpop.trf.xlu0
        %v819 = vpop.trf.xlu0
        %v820 = vpop.trf.xlu0
        %v821 = vpop.trf.xlu0
        %s822 = scalar_lea.vmem %s166, 80 [#allocation6]
        %823 = vst.msk [vmem:[%s822] sm:$0xff] %vm217, %v806
        %v824 = vsub.f32 %v671, %v709
        %v825 = vsub.f32 %v824, %v673
        %v826 = vadd.f32 %v825, %v711
        %827 = vxpose.xlu0.b32.start [1/16] %v826, 128
        %828 = vxpose.xlu0.b32.cont [2/16] 0.0, 128
        %829 = vxpose.xlu0.b32.cont [3/16] 0.0, 128
        %830 = vxpose.xlu0.b32.cont [4/16] 0.0, 128
        %831 = vxpose.xlu0.b32.cont [5/16] 0.0, 128
        %832 = vxpose.xlu0.b32.cont [6/16] 0.0, 128
        %833 = vxpose.xlu0.b32.cont [7/16] 0.0, 128
        %834 = vxpose.xlu0.b32.cont [8/16] 0.0, 128
        %835 = vxpose.xlu0.b32.cont [9/16] 0.0, 128
        %836 = vxpose.xlu0.b32.cont [10/16] 0.0, 128
        %837 = vxpose.xlu0.b32.cont [11/16] 0.0, 128
        %838 = vxpose.xlu0.b32.cont [12/16] 0.0, 128
        %839 = vxpose.xlu0.b32.cont [13/16] 0.0, 128
        %840 = vxpose.xlu0.b32.cont [14/16] 0.0, 128
        %841 = vxpose.xlu0.b32.cont [15/16] 0.0, 128
        %842 = vxpose.xlu0.b32.end [16/16] 0.0, 128
        %v843 = vpop.trf.xlu0
        %v844 = vpop.trf.xlu0
        %v845 = vpop.trf.xlu0
        %v846 = vpop.trf.xlu0
        %v847 = vpop.trf.xlu0
        %v848 = vpop.trf.xlu0
        %v849 = vpop.trf.xlu0
        %v850 = vpop.trf.xlu0
        %v851 = vpop.trf.xlu0
        %v852 = vpop.trf.xlu0
        %v853 = vpop.trf.xlu0
        %v854 = vpop.trf.xlu0
        %v855 = vpop.trf.xlu0
        %v856 = vpop.trf.xlu0
        %v857 = vpop.trf.xlu0
        %v858 = vpop.trf.xlu0
        %s859 = scalar_lea.vmem %s166, 112 [#allocation6]
        %860 = vst.msk [vmem:[%s859] sm:$0xff] %vm217, %v843
        %861 = vxpose.xlu0.b32.start [1/16] %v176, 128
        %862 = vxpose.xlu0.b32.cont [2/16] 0.0, 128
        %863 = vxpose.xlu0.b32.cont [3/16] 0.0, 128
        %864 = vxpose.xlu0.b32.cont [4/16] 0.0, 128
        %865 = vxpose.xlu0.b32.cont [5/16] 0.0, 128
        %866 = vxpose.xlu0.b32.cont [6/16] 0.0, 128
        %867 = vxpose.xlu0.b32.cont [7/16] 0.0, 128
        %868 = vxpose.xlu0.b32.cont [8/16] 0.0, 128
        %869 = vxpose.xlu0.b32.cont [9/16] 0.0, 128
        %870 = vxpose.xlu0.b32.cont [10/16] 0.0, 128
        %871 = vxpose.xlu0.b32.cont [11/16] 0.0, 128
        %872 = vxpose.xlu0.b32.cont [12/16] 0.0, 128
        %873 = vxpose.xlu0.b32.cont [13/16] 0.0, 128
        %874 = vxpose.xlu0.b32.cont [14/16] 0.0, 128
        %875 = vxpose.xlu0.b32.cont [15/16] 0.0, 128
        %876 = vxpose.xlu0.b32.end [16/16] 0.0, 128
        %v877 = vpop.trf.xlu0
        %v878 = vpop.trf.xlu0
        %v879 = vpop.trf.xlu0
        %v880 = vpop.trf.xlu0
        %v881 = vpop.trf.xlu0
        %v882 = vpop.trf.xlu0
        %v883 = vpop.trf.xlu0
        %v884 = vpop.trf.xlu0
        %v885 = vpop.trf.xlu0
        %v886 = vpop.trf.xlu0
        %v887 = vpop.trf.xlu0
        %v888 = vpop.trf.xlu0
        %v889 = vpop.trf.xlu0
        %v890 = vpop.trf.xlu0
        %v891 = vpop.trf.xlu0
        %v892 = vpop.trf.xlu0
        %893 = vst.msk [vmem:[#allocation2] sm:$0xff] %vm217, %v877
        %894 = vst.msk [vmem:[#allocation2 + $0x8] sm:$0xff] %vm217, %v878
        %v895 = vld [vmem:[#allocation2] ss:$2 sm:$0xff]
        %v896 = vmul.f32 %v895, 0.5
        %v897 = vld [vmem:[%s222] ss:$2 sm:$0xff]
        %v898 = vmul.f32 %v897, 0.5
        %899 = vxpose.xlu0.b32.start [1/16] %v184, 128
        %900 = vxpose.xlu0.b32.cont [2/16] 0.0, 128
        %901 = vxpose.xlu0.b32.cont [3/16] 0.0, 128
        %902 = vxpose.xlu0.b32.cont [4/16] 0.0, 128
        %903 = vxpose.xlu0.b32.cont [5/16] 0.0, 128
        %904 = vxpose.xlu0.b32.cont [6/16] 0.0, 128
        %905 = vxpose.xlu0.b32.cont [7/16] 0.0, 128
        %906 = vxpose.xlu0.b32.cont [8/16] 0.0, 128
        %907 = vxpose.xlu0.b32.cont [9/16] 0.0, 128
        %908 = vxpose.xlu0.b32.cont [10/16] 0.0, 128
        %909 = vxpose.xlu0.b32.cont [11/16] 0.0, 128
        %910 = vxpose.xlu0.b32.cont [12/16] 0.0, 128
        %911 = vxpose.xlu0.b32.cont [13/16] 0.0, 128
        %912 = vxpose.xlu0.b32.cont [14/16] 0.0, 128
        %913 = vxpose.xlu0.b32.cont [15/16] 0.0, 128
        %914 = vxpose.xlu0.b32.end [16/16] 0.0, 128
        %v915 = vpop.trf.xlu0
        %v916 = vpop.trf.xlu0
        %v917 = vpop.trf.xlu0
        %v918 = vpop.trf.xlu0
        %v919 = vpop.trf.xlu0
        %v920 = vpop.trf.xlu0
        %v921 = vpop.trf.xlu0
        %v922 = vpop.trf.xlu0
        %v923 = vpop.trf.xlu0
        %v924 = vpop.trf.xlu0
        %v925 = vpop.trf.xlu0
        %v926 = vpop.trf.xlu0
        %v927 = vpop.trf.xlu0
        %v928 = vpop.trf.xlu0
        %v929 = vpop.trf.xlu0
        %v930 = vpop.trf.xlu0
        %931 = vst.msk [vmem:[#allocation2] sm:$0xff] %vm217, %v915
        %932 = vst.msk [vmem:[#allocation2 + $0x8] sm:$0xff] %vm217, %v916
        %v933 = vld [vmem:[#allocation2] ss:$2 sm:$0xff]
        %v934 = vmul.f32 %v933, 0.5
        %v935 = vld [vmem:[%s222] ss:$2 sm:$0xff]
        %v936 = vmul.f32 %v935, 0.5
        %v937 = vadd.f32 %v896, %v934
        %v938 = vadd.f32 %v937, %v898
        %v939 = vadd.f32 %v938, %v936
        %940 = vxpose.xlu0.b32.start [1/16] %v939, 128
        %941 = vxpose.xlu0.b32.cont [2/16] 0.0, 128
        %942 = vxpose.xlu0.b32.cont [3/16] 0.0, 128
        %943 = vxpose.xlu0.b32.cont [4/16] 0.0, 128
        %944 = vxpose.xlu0.b32.cont [5/16] 0.0, 128
        %945 = vxpose.xlu0.b32.cont [6/16] 0.0, 128
        %946 = vxpose.xlu0.b32.cont [7/16] 0.0, 128
        %947 = vxpose.xlu0.b32.cont [8/16] 0.0, 128
        %948 = vxpose.xlu0.b32.cont [9/16] 0.0, 128
        %949 = vxpose.xlu0.b32.cont [10/16] 0.0, 128
        %950 = vxpose.xlu0.b32.cont [11/16] 0.0, 128
        %951 = vxpose.xlu0.b32.cont [12/16] 0.0, 128
        %952 = vxpose.xlu0.b32.cont [13/16] 0.0, 128
        %953 = vxpose.xlu0.b32.cont [14/16] 0.0, 128
        %954 = vxpose.xlu0.b32.cont [15/16] 0.0, 128
        %955 = vxpose.xlu0.b32.end [16/16] 0.0, 128
        %v956 = vpop.trf.xlu0
        %v957 = vpop.trf.xlu0
        %v958 = vpop.trf.xlu0
        %v959 = vpop.trf.xlu0
        %v960 = vpop.trf.xlu0
        %v961 = vpop.trf.xlu0
        %v962 = vpop.trf.xlu0
        %v963 = vpop.trf.xlu0
        %v964 = vpop.trf.xlu0
        %v965 = vpop.trf.xlu0
        %v966 = vpop.trf.xlu0
        %v967 = vpop.trf.xlu0
        %v968 = vpop.trf.xlu0
        %v969 = vpop.trf.xlu0
        %v970 = vpop.trf.xlu0
        %v971 = vpop.trf.xlu0
        %s972 = scalar_lea.vmem %s166, 24 [#allocation6]
        %973 = vst.msk [vmem:[%s972] sm:$0xff] %vm217, %v956
        %v974 = vsub.f32 0.0, %v896
        %v975 = vsub.f32 %v974, %v934
        %v976 = vadd.f32 %v975, %v898
        %v977 = vadd.f32 %v976, %v936
        %978 = vxpose.xlu0.b32.start [1/16] %v977, 128
        %979 = vxpose.xlu0.b32.cont [2/16] 0.0, 128
        %980 = vxpose.xlu0.b32.cont [3/16] 0.0, 128
        %981 = vxpose.xlu0.b32.cont [4/16] 0.0, 128
        %982 = vxpose.xlu0.b32.cont [5/16] 0.0, 128
        %983 = vxpose.xlu0.b32.cont [6/16] 0.0, 128
        %984 = vxpose.xlu0.b32.cont [7/16] 0.0, 128
        %985 = vxpose.xlu0.b32.cont [8/16] 0.0, 128
        %986 = vxpose.xlu0.b32.cont [9/16] 0.0, 128
        %987 = vxpose.xlu0.b32.cont [10/16] 0.0, 128
        %988 = vxpose.xlu0.b32.cont [11/16] 0.0, 128
        %989 = vxpose.xlu0.b32.cont [12/16] 0.0, 128
        %990 = vxpose.xlu0.b32.cont [13/16] 0.0, 128
        %991 = vxpose.xlu0.b32.cont [14/16] 0.0, 128
        %992 = vxpose.xlu0.b32.cont [15/16] 0.0, 128
        %993 = vxpose.xlu0.b32.end [16/16] 0.0, 128
        %v994 = vpop.trf.xlu0
        %v995 = vpop.trf.xlu0
        %v996 = vpop.trf.xlu0
        %v997 = vpop.trf.xlu0
        %v998 = vpop.trf.xlu0
        %v999 = vpop.trf.xlu0
        %v1000 = vpop.trf.xlu0
        %v1001 = vpop.trf.xlu0
        %v1002 = vpop.trf.xlu0
        %v1003 = vpop.trf.xlu0
        %v1004 = vpop.trf.xlu0
        %v1005 = vpop.trf.xlu0
        %v1006 = vpop.trf.xlu0
        %v1007 = vpop.trf.xlu0
        %v1008 = vpop.trf.xlu0
        %v1009 = vpop.trf.xlu0
        %s1010 = scalar_lea.vmem %s166, 56 [#allocation6]
        %1011 = vst.msk [vmem:[%s1010] sm:$0xff] %vm217, %v994
        %v1012 = vadd.f32 %v974, %v934
        %v1013 = vsub.f32 %v1012, %v898
        %v1014 = vadd.f32 %v1013, %v936
        %1015 = vxpose.xlu0.b32.start [1/16] %v1014, 128
        %1016 = vxpose.xlu0.b32.cont [2/16] 0.0, 128
        %1017 = vxpose.xlu0.b32.cont [3/16] 0.0, 128
        %1018 = vxpose.xlu0.b32.cont [4/16] 0.0, 128
        %1019 = vxpose.xlu0.b32.cont [5/16] 0.0, 128
        %1020 = vxpose.xlu0.b32.cont [6/16] 0.0, 128
        %1021 = vxpose.xlu0.b32.cont [7/16] 0.0, 128
        %1022 = vxpose.xlu0.b32.cont [8/16] 0.0, 128
        %1023 = vxpose.xlu0.b32.cont [9/16] 0.0, 128
        %1024 = vxpose.xlu0.b32.cont [10/16] 0.0, 128
        %1025 = vxpose.xlu0.b32.cont [11/16] 0.0, 128
        %1026 = vxpose.xlu0.b32.cont [12/16] 0.0, 128
        %1027 = vxpose.xlu0.b32.cont [13/16] 0.0, 128
        %1028 = vxpose.xlu0.b32.cont [14/16] 0.0, 128
        %1029 = vxpose.xlu0.b32.cont [15/16] 0.0, 128
        %1030 = vxpose.xlu0.b32.end [16/16] 0.0, 128
        %v1031 = vpop.trf.xlu0
        %v1032 = vpop.trf.xlu0
        %v1033 = vpop.trf.xlu0
        %v1034 = vpop.trf.xlu0
        %v1035 = vpop.trf.xlu0
        %v1036 = vpop.trf.xlu0
        %v1037 = vpop.trf.xlu0
        %v1038 = vpop.trf.xlu0
        %v1039 = vpop.trf.xlu0
        %v1040 = vpop.trf.xlu0
        %v1041 = vpop.trf.xlu0
        %v1042 = vpop.trf.xlu0
        %v1043 = vpop.trf.xlu0
        %v1044 = vpop.trf.xlu0
        %v1045 = vpop.trf.xlu0
        %v1046 = vpop.trf.xlu0
        %s1047 = scalar_lea.vmem %s166, 88 [#allocation6]
        %1048 = vst.msk [vmem:[%s1047] sm:$0xff] %vm217, %v1031
        %v1049 = vsub.f32 %v896, %v934
        %v1050 = vsub.f32 %v1049, %v898
        %v1051 = vadd.f32 %v1050, %v936
        %1052 = vxpose.xlu0.b32.start [1/16] %v1051, 128
        %1053 = vxpose.xlu0.b32.cont [2/16] 0.0, 128
        %1054 = vxpose.xlu0.b32.cont [3/16] 0.0, 128
        %1055 = vxpose.xlu0.b32.cont [4/16] 0.0, 128
        %1056 = vxpose.xlu0.b32.cont [5/16] 0.0, 128
        %1057 = vxpose.xlu0.b32.cont [6/16] 0.0, 128
        %1058 = vxpose.xlu0.b32.cont [7/16] 0.0, 128
        %1059 = vxpose.xlu0.b32.cont [8/16] 0.0, 128
        %1060 = vxpose.xlu0.b32.cont [9/16] 0.0, 128
        %1061 = vxpose.xlu0.b32.cont [10/16] 0.0, 128
        %1062 = vxpose.xlu0.b32.cont [11/16] 0.0, 128
        %1063 = vxpose.xlu0.b32.cont [12/16] 0.0, 128
        %1064 = vxpose.xlu0.b32.cont [13/16] 0.0, 128
        %1065 = vxpose.xlu0.b32.cont [14/16] 0.0, 128
        %1066 = vxpose.xlu0.b32.cont [15/16] 0.0, 128
        %1067 = vxpose.xlu0.b32.end [16/16] 0.0, 128
        %v1068 = vpop.trf.xlu0
        %v1069 = vpop.trf.xlu0
        %v1070 = vpop.trf.xlu0
        %v1071 = vpop.trf.xlu0
        %v1072 = vpop.trf.xlu0
        %v1073 = vpop.trf.xlu0
        %v1074 = vpop.trf.xlu0
        %v1075 = vpop.trf.xlu0
        %v1076 = vpop.trf.xlu0
        %v1077 = vpop.trf.xlu0
        %v1078 = vpop.trf.xlu0
        %v1079 = vpop.trf.xlu0
        %v1080 = vpop.trf.xlu0
        %v1081 = vpop.trf.xlu0
        %v1082 = vpop.trf.xlu0
        %v1083 = vpop.trf.xlu0
        %s1084 = scalar_lea.vmem %s166, 120 [#allocation6]
        %1085 = vst.msk [vmem:[%s1084] sm:$0xff] %vm217, %v1068
        %s1086 = sand.u32 %s79, 1
        %s1087 = scalar_lea.sflag [#allocation5], %s1086
        %s1088 = sand.u32 %s79, 1
        %s1089 = smul.addr %s1088, 128
        %s1090 = scalar_lea.vmem [#allocation6], %s1089
        // Predicated region
        $region29: #{tpu_custom_call.1} parent=23 // pred_check
          %p1091 = pneg %p89
        $region30: #{tpu_custom_call.1} parent=23 // pred_check_branch
          %1093 = sbr.rel (%p1091) target = $region32
        $region31: #{tpu_custom_call.1} parent=23 // pred_region
          %s1094 = smul.u32 4, %s24
          %s1096 = ssub.s32 2048, 2048
          %1097 = vsyncadd %s1087, %s1096
          %s1098 = sadd.s32 %s25, %s1094
          %s1099 = smul.addr %s23, 16
          %s1100 = sadd.s32 %s1098, %s1099
          %s1101 = smul.addr %s1100, 128
          %s1102 = scalar_lea.hbm %s1, %s1101
          %s1103 = sshll.u32 %s1090, 4
          %s1104 = int_to_ptr.vmem [resolvable:$true] %s1103
          %1109 = dma.vmem_to_hbm [thread:$0]  %s1104, 2048, %s1102, %s1087, 128, 128, 8
        $region32: #{tpu_custom_call.1} parent=23 // pred_fallthru
          _
      $region24: #{tpu_custom_call.1} parent=5 // pred_fallthru
        _
      %p1110 = scmp.le.s32.totalorder 2, %s13
      // Predicated region
      $region33: #{tpu_custom_call.1} parent=5 // pred_check
        %p1111 = pneg %p1110
      $region34: #{tpu_custom_call.1} parent=5 // pred_check_branch
        %1113 = sbr.rel (%p1111) target = $region36
      $region35: #{tpu_custom_call.1} parent=5 // pred_region
        %s1114 = ssub.s32 %s13, 2
        // Predicated region
        $region37: #{tpu_custom_call.1} parent=35 // pred_check
          %p1115 = pneg %p95
        $region38: #{tpu_custom_call.1} parent=35 // pred_check_branch
          %1117 = sbr.rel (%p1115) target = $region40
        $region39: #{tpu_custom_call.1} parent=35 // pred_region
          %s1118 = sand.u32 %s80, 1
          %s1119 = scalar_lea.sflag [#allocation5], %s1118
          %s1120 = sand.u32 %s80, 1
          %s1121 = smul.addr %s1120, 128
          %s1122 = scalar_lea.vmem [#allocation6], %s1121
          %1123 = dma.done %s1119, 2048
        $region40: #{tpu_custom_call.1} parent=35 // pred_fallthru
          _
      $region36: #{tpu_custom_call.1} parent=5 // pred_fallthru
        _
    $region6: #{tpu_custom_call.1} parent=1 // loop_footer
      %s17 = sadd.s32 1, %s13
    $region7: #{tpu_custom_call.1} parent=1 // loop_footer_branch
      %12 = sbr.rel target = $region3
    $region8: #{tpu_custom_call.1} parent=1 // loop_exit
      _
    %1124 = vsyncpa [#allocation4], 1
    %s1125 = scalar_lea.sflag [#allocation4], 1
    %1126 = vsyncpa %s1125, 1
    %1127 = vsyncpa [#allocation5], 1
    %s1128 = scalar_lea.sflag [#allocation5], 1
    %1129 = vsyncpa %s1128, 1

</llo_original>
